<compile_context>
chip_gen: v5e
topology: v5e:2x2
jax: 0.10.0
libtpu: 0.0.40
codegen_flags: <defaults>
</compile_context>

<pallas_src>
import jax
import jax.numpy as jnp
from jax.experimental import pallas as pl
from jax.experimental.pallas import tpu as pltpu


MXU_DTYPE = jnp.bfloat16   # native MXU operand dtype on v6e/v7x; f32 accumulation
SUBLANE = 8


# ------------------------- fused whole-model kernel --------------------------
def _build_fused_lstm_kernel(num_layers, seq_len, batch_blk, hidden_dim, input_dim,
                             unroll):
    """Builds the fused (all LSTM layers + FC) kernel for static shapes."""
    L, T, Bb, H, Din = num_layers, seq_len, batch_blk, hidden_dim, input_dim

    def kernel(x_ref, *refs):
        # refs = [wih_0, whh_0, b_0, ..., wih_{L-1}, whh_{L-1}, b_{L-1},
        #         fc_w, fc_b, out_ref, gate_ping, gate_pong]
        fcw_ref, fcb_ref, out_ref, g_a, g_b = refs[3 * L:]
        gate_bufs = (g_a, g_b)

        # ---- layer-0 input projection: ONE batched MXU matmul over all T*Bb rows
        # (bf16 operands, f32 accumulation, fused bias).  Layers > 0 get their
        # input projections computed inside the previous layer's recurrence.
        x_seq = x_ref[...].reshape(T * Bb, Din).astype(MXU_DTYPE)   # layout no-op
        g0 = jnp.dot(x_seq, refs[0][...].astype(MXU_DTYPE),
                     preferred_element_type=jnp.float32) + refs[2][...]
        g_a[...] = g0.reshape(T, Bb, 4 * H)

        h_last = None
        for l in range(L):
            cur = gate_bufs[l % 2]                        # this layer's gate pre-acts
            whh = refs[3 * l + 1][...].astype(MXU_DTYPE)  # (H, 4H), loop-invariant
            last_layer = (l == L - 1)
            if not last_layer:
                nxt = gate_bufs[(l + 1) % 2]              # next layer's gate pre-acts
                wih_next = refs[3 * (l + 1)][...].astype(MXU_DTYPE)   # (H, 4H)
                b_next = refs[3 * (l + 1) + 2][...]                   # (1, 4H)

            def step(t, carry):
                h, c = carry
                gates = cur[t] + jnp.dot(h.astype(MXU_DTYPE), whh,
                                         preferred_element_type=jnp.float32)
                # Two full-width EUP pushes over the whole (Bb, 4H) vreg, then
                # take the 32-lane [i, f, g, o] slices from those results.
                sig = jax.nn.sigmoid(gates)
                tnh = jnp.tanh(gates)
                i_g = sig[:, 0 * H:1 * H]
                f_g = sig[:, 1 * H:2 * H]
                g_g = tnh[:, 2 * H:3 * H]
                o_g = sig[:, 3 * H:4 * H]
                c_new = f_g * c + i_g * g_g
                h_new = o_g * jnp.tanh(c_new)
                if not last_layer:
                    # Hide the next layer's input projection under this layer's
                    # recurrence: the MXU slot is nearly idle here.
                    nxt[t] = jnp.dot(h_new.astype(MXU_DTYPE), wih_next,
                                     preferred_element_type=jnp.float32) + b_next
                return (h_new, c_new)

            h0 = jnp.zeros((Bb, H), jnp.float32)
            c0 = jnp.zeros((Bb, H), jnp.float32)
            # TODO(synk): inter-layer dropout skipped (inference semantics).
            h_last, _ = jax.lax.fori_loop(0, T, step, (h0, c0), unroll=unroll)

        # ---- fused final Linear on the last time step's hidden state.
        out_ref[...] = (
            jnp.dot(h_last.astype(MXU_DTYPE), fcw_ref[...].astype(MXU_DTYPE),
                    preferred_element_type=jnp.float32) + fcb_ref[...]
        ).astype(out_ref.dtype)

    return kernel


@jax.jit
def lstm_model_forward(params, x_btf):
    """x_btf: (B, T, input_dim) -> (B, output_dim), matching LSTMModel.forward (eval)."""
    layers = params["layers"]
    L = len(layers)
    B, T, Din = x_btf.shape
    H = layers[0]["w_hh_t"].shape[0]
    O = params["fc_w_t"].shape[1]

    # Pad batch to a sublane multiple (8).  For B >= 16 split into 2 batch blocks
    # ("parallel" grid axis) so v7x's two TensorCores each run an independent
    # batch shard of the recurrence; on v5e/v6e the blocks just run back to back.
    Bp0 = max(SUBLANE, ((B + SUBLANE - 1) // SUBLANE) * SUBLANE)
    if B >= 16:
        n_blk = 2
        Bb = -(-Bp0 // (n_blk * SUBLANE)) * SUBLANE
    else:
        n_blk = 1
        Bb = Bp0
    Bp = n_blk * Bb
    # TODO(synk): for large B also pad Bb toward the MXU row count (128/256) to
    # amortize per-push MXU latency; unnecessary at this toy batch size.

    x = jnp.transpose(x_btf, (1, 0, 2)).astype(jnp.float32)     # time-major (T, B, D)
    if Bp != B:
        x = jnp.pad(x, ((0, 0), (0, Bp - B), (0, 0)))

    args = [x]
    in_specs = [pl.BlockSpec((T, Bb, Din), lambda b: (0, b, 0))]
    for lp in layers:
        d_in = lp["w_ih_t"].shape[0]
        args += [lp["w_ih_t"], lp["w_hh_t"], lp["bias"]]
        in_specs += [
            pl.BlockSpec((d_in, 4 * H), lambda b: (0, 0)),
            pl.BlockSpec((H, 4 * H), lambda b: (0, 0)),
            pl.BlockSpec((1, 4 * H), lambda b: (0, 0)),
        ]
    args += [params["fc_w_t"], params["fc_b"]]
    in_specs += [
        pl.BlockSpec((H, O), lambda b: (0, 0)),
        pl.BlockSpec((1, O), lambda b: (0, 0)),
    ]

    unroll = True if T <= 16 else 8   # partial unroll keeps code size sane at large T
    kernel = _build_fused_lstm_kernel(L, T, Bb, H, Din, unroll)

    out_p = pl.pallas_call(
        kernel,
        out_shape=jax.ShapeDtypeStruct((Bp, O), jnp.float32),
        grid_spec=pltpu.PrefetchScalarGridSpec(
            num_scalar_prefetch=0,
            grid=(n_blk,),
            in_specs=in_specs,
            out_specs=pl.BlockSpec((Bb, O), lambda b: (b, 0)),
            scratch_shapes=[
                pltpu.VMEM((T, Bb, 4 * H), jnp.float32),   # ping gate pre-acts
                pltpu.VMEM((T, Bb, 4 * H), jnp.float32),   # pong gate pre-acts
            ],
        ),
        compiler_params=pltpu.CompilerParams(
            dimension_semantics=("parallel",),
        ),
    )(*args)
    return out_p[:B]


# --------------------------------- params ------------------------------------
def init_lstm_model_params(key, input_dim, hidden_dim, layer_dim, output_dim):
    """Deterministic init mirroring PyTorch shapes: uniform(-1/sqrt(H), 1/sqrt(H))."""
    bound = 1.0 / jnp.sqrt(jnp.float32(hidden_dim))
    params = {"layers": []}
    for layer in range(layer_dim):
        d_in = input_dim if layer == 0 else hidden_dim
        key, k1, k2, k3, k4 = jax.random.split(key, 5)
        w_ih = jax.random.uniform(k1, (4 * hidden_dim, d_in), jnp.float32, -bound, bound)
        w_hh = jax.random.uniform(k2, (4 * hidden_dim, hidden_dim), jnp.float32, -bound, bound)
        b_ih = jax.random.uniform(k3, (4 * hidden_dim,), jnp.float32, -bound, bound)
        b_hh = jax.random.uniform(k4, (4 * hidden_dim,), jnp.float32, -bound, bound)
        params["layers"].append(
            {
                "w_ih_t": jnp.transpose(w_ih),                    # (Din, 4H)
                "w_hh_t": jnp.transpose(w_hh),                    # (H, 4H)
                "bias": (b_ih + b_hh).reshape(1, 4 * hidden_dim)  # (1, 4H)
            }
        )
    key, k1, k2 = jax.random.split(key, 3)
    fc_bound = 1.0 / jnp.sqrt(jnp.float32(hidden_dim))
    w_fc = jax.random.uniform(k1, (output_dim, hidden_dim), jnp.float32, -fc_bound, fc_bound)
    b_fc = jax.random.uniform(k2, (output_dim,), jnp.float32, -fc_bound, fc_bound)
    params["fc_w_t"] = jnp.transpose(w_fc)                        # (H, O)
    params["fc_b"] = b_fc.reshape(1, output_dim)                  # (1, O)
    return params


# ----------------------------- Pure-JAX reference -----------------------------
def _reference_forward(params, x_btf, mm_dtype=jnp.float32):
    def mm(a, b):
        return jnp.dot(a.astype(mm_dtype), b.astype(mm_dtype),
                       preferred_element_type=jnp.float32)

    x = jnp.transpose(x_btf, (1, 0, 2)).astype(jnp.float32)
    T, B, _ = x.shape
    for lp in params["layers"]:
        H = lp["w_hh_t"].shape[0]
        h = jnp.zeros((B, H), jnp.float32)
        c = jnp.zeros((B, H), jnp.float32)
        ys = []
        for t in range(T):
            gates = mm(x[t], lp["w_ih_t"]) + mm(h, lp["w_hh_t"]) + lp["bias"]
            i = jax.nn.sigmoid(gates[:, 0:H])
            f = jax.nn.sigmoid(gates[:, H:2 * H])
            g = jnp.tanh(gates[:, 2 * H:3 * H])
            o = jax.nn.sigmoid(gates[:, 3 * H:4 * H])
            c = f * c + i * g
            h = o * jnp.tanh(c)
            ys.append(h)
        x = jnp.stack(ys, axis=0)
    return mm(x[-1], params["fc_w_t"]) + params["fc_b"]


if __name__ == "__main__":
    # Small shapes consistent with the module's forward contract.
    batch, seq_len = 4, 8
    input_dim, hidden_dim, layer_dim, output_dim = 16, 32, 2, 8
    dropout_prob = 0.2  # no-op at inference

    key = jax.random.PRNGKey(0)
    key, pkey, xkey = jax.random.split(key, 3)
    params = init_lstm_model_params(pkey, input_dim, hidden_dim, layer_dim, output_dim)
    x = jax.random.normal(xkey, (batch, seq_len, input_dim), jnp.float32)

    out = jax.block_until_ready(lstm_model_forward(params, x))
    assert out.shape == (batch, output_dim), out.shape

    # Matched-precision reference (bf16 MXU operands, f32 accumulation): tight check.
    ref_bf16 = _reference_forward(params, x, mm_dtype=MXU_DTYPE)
    err_bf16 = float(jnp.max(jnp.abs(out - ref_bf16)))
    assert jnp.allclose(out, ref_bf16, atol=2e-3, rtol=2e-3), err_bf16

    # Full-f32 reference: loose check (accounts for bf16 MXU operand rounding).
    ref_f32 = _reference_forward(params, x, mm_dtype=jnp.float32)
    err_f32 = float(jnp.max(jnp.abs(out - ref_f32)))
    assert jnp.allclose(out, ref_f32, atol=5e-2, rtol=5e-2), err_f32

    print("KERNEL_OK")
</pallas_src>

<mosaic_0001>
module attributes {stable_mosaic.version = 11 : i64} {
  func.func @kernel(%arg0: i32, %arg1: memref<8x8x16xf32, #tpu.memory_space<vmem>>, %arg2: memref<16x128xf32, #tpu.memory_space<vmem>>, %arg3: memref<32x128xf32, #tpu.memory_space<vmem>>, %arg4: memref<1x128xf32, #tpu.memory_space<vmem>>, %arg5: memref<32x128xf32, #tpu.memory_space<vmem>>, %arg6: memref<32x128xf32, #tpu.memory_space<vmem>>, %arg7: memref<1x128xf32, #tpu.memory_space<vmem>>, %arg8: memref<32x8xf32, #tpu.memory_space<vmem>>, %arg9: memref<1x8xf32, #tpu.memory_space<vmem>>, %arg10: memref<8x8xf32, #tpu.memory_space<vmem>>, %arg11: memref<8x8x128xf32, #tpu.memory_space<vmem>>, %arg12: memref<8x8x128xf32, #tpu.memory_space<vmem>>) attributes {dimension_semantics = [#tpu.dimension_semantics<parallel>], iteration_bounds = array<i64: 1>, scalar_prefetch = 0 : i64, scratch_operands = 2 : i64, tpu.core_type = #tpu.core_type<tc>, window_params = [{transform_indices = @transform_0, window_bounds = array<i64: 8, 8, 16>}, {pipeline_mode = #tpu.pipeline_mode<synchronous>, transform_indices = @transform_1, window_bounds = array<i64: 16, 128>}, {pipeline_mode = #tpu.pipeline_mode<synchronous>, transform_indices = @transform_2, window_bounds = array<i64: 32, 128>}, {pipeline_mode = #tpu.pipeline_mode<synchronous>, transform_indices = @transform_3, window_bounds = array<i64: 1, 128>}, {pipeline_mode = #tpu.pipeline_mode<synchronous>, transform_indices = @transform_4, window_bounds = array<i64: 32, 128>}, {pipeline_mode = #tpu.pipeline_mode<synchronous>, transform_indices = @transform_5, window_bounds = array<i64: 32, 128>}, {pipeline_mode = #tpu.pipeline_mode<synchronous>, transform_indices = @transform_6, window_bounds = array<i64: 1, 128>}, {pipeline_mode = #tpu.pipeline_mode<synchronous>, transform_indices = @transform_7, window_bounds = array<i64: 32, 8>}, {pipeline_mode = #tpu.pipeline_mode<synchronous>, transform_indices = @transform_8, window_bounds = array<i64: 1, 8>}, {transform_indices = @transform_9, window_bounds = array<i64: 8, 8>}]} {
    %c0 = arith.constant 0 : index
    %c0_0 = arith.constant 0 : index
    %c0_1 = arith.constant 0 : index
    %0 = vector.load %arg1[%c0, %c0_0, %c0_1] : memref<8x8x16xf32, #tpu.memory_space<vmem>>, vector<8x8x16xf32>
    %1 = vector.shape_cast %0 : vector<8x8x16xf32> to vector<64x16xf32>
    %2 = arith.truncf %1 : vector<64x16xf32> to vector<64x16xbf16>
    %c0_2 = arith.constant 0 : index
    %c0_3 = arith.constant 0 : index
    %3 = vector.load %arg2[%c0_2, %c0_3] : memref<16x128xf32, #tpu.memory_space<vmem>>, vector<16x128xf32>
    %4 = arith.truncf %3 : vector<16x128xf32> to vector<16x128xbf16>
    %cst = arith.constant dense<0.000000e+00> : vector<64x128xf32>
    %5 = tpu.matmul %2, %4, %cst {dimension_numbers = #tpu.dot_dimension_numbers<[1], [0], [0], [1], [0, 0, 1, 1], [], []>} : vector<64x16xbf16>, vector<16x128xbf16>, vector<64x128xf32> -> vector<64x128xf32>
    %c0_4 = arith.constant 0 : index
    %c0_5 = arith.constant 0 : index
    %6 = vector.load %arg4[%c0_4, %c0_5] : memref<1x128xf32, #tpu.memory_space<vmem>>, vector<1x128xf32>
    %7 = vector.broadcast %6 : vector<1x128xf32> to vector<64x128xf32>
    %8 = arith.addf %5, %7 : vector<64x128xf32>
    %9 = vector.shape_cast %8 : vector<64x128xf32> to vector<8x8x128xf32>
    %c0_6 = arith.constant 0 : index
    %c0_7 = arith.constant 0 : index
    %c0_8 = arith.constant 0 : index
    %10 = vector.load %arg11[%c0_6, %c0_7, %c0_8] : memref<8x8x128xf32, #tpu.memory_space<vmem>>, vector<8x8x128xf32>
    tpu.vector_store %arg11[%c0_6, %c0_7, %c0_8], %9 {strides = array<i32>} : memref<8x8x128xf32, #tpu.memory_space<vmem>>, vector<8x8x128xf32>,
    %c0_9 = arith.constant 0 : index
    %c0_10 = arith.constant 0 : index
    %11 = vector.load %arg3[%c0_9, %c0_10] : memref<32x128xf32, #tpu.memory_space<vmem>>, vector<32x128xf32>
    %12 = arith.truncf %11 : vector<32x128xf32> to vector<32x128xbf16>
    %c0_11 = arith.constant 0 : index
    %c0_12 = arith.constant 0 : index
    %13 = vector.load %arg5[%c0_11, %c0_12] : memref<32x128xf32, #tpu.memory_space<vmem>>, vector<32x128xf32>
    %14 = arith.truncf %13 : vector<32x128xf32> to vector<32x128xbf16>
    %c0_13 = arith.constant 0 : index
    %c0_14 = arith.constant 0 : index
    %15 = vector.load %arg7[%c0_13, %c0_14] : memref<1x128xf32, #tpu.memory_space<vmem>>, vector<1x128xf32>
    %cst_15 = arith.constant 0.000000e+00 : f32
    %16 = vector.broadcast %cst_15 : f32 to vector<8x32xf32>
    %cst_16 = arith.constant 0.000000e+00 : f32
    %17 = vector.broadcast %cst_16 : f32 to vector<8x32xf32>
    %c0_i32 = arith.constant 0 : i32
    %18 = arith.index_cast %c0_i32 : i32 to index
    %c0_17 = arith.constant 0 : index
    %c0_18 = arith.constant 0 : index
    %19 = vector.load %arg11[%18, %c0_17, %c0_18] : memref<8x8x128xf32, #tpu.memory_space<vmem>>, vector<1x8x128xf32>
    %20 = vector.shape_cast %19 : vector<1x8x128xf32> to vector<8x128xf32>
    %21 = arith.truncf %16 : vector<8x32xf32> to vector<8x32xbf16>
    %cst_19 = arith.constant dense<0.000000e+00> : vector<8x128xf32>
    %22 = tpu.matmul %21, %12, %cst_19 {dimension_numbers = #tpu.dot_dimension_numbers<[1], [0], [0], [1], [0, 0, 1, 1], [], []>} : vector<8x32xbf16>, vector<32x128xbf16>, vector<8x128xf32> -> vector<8x128xf32>
    %23 = arith.addf %20, %22 : vector<8x128xf32>
    %24 = arith.negf %23 : vector<8x128xf32>
    %25 = math.exp %24 : vector<8x128xf32>
    %cst_20 = arith.constant 1.000000e+00 : f32
    %26 = vector.broadcast %cst_20 : f32 to vector<8x128xf32>
    %27 = arith.addf %26, %25 : vector<8x128xf32>
    %28 = arith.divf %26, %27 : vector<8x128xf32>
    %29 = math.tanh %23 : vector<8x128xf32>
    %30 = vector.extract_strided_slice %28 {offsets = [0, 0], sizes = [8, 32], strides = [1, 1]} : vector<8x128xf32> to vector<8x32xf32>
    %31 = vector.extract_strided_slice %28 {offsets = [0, 32], sizes = [8, 32], strides = [1, 1]} : vector<8x128xf32> to vector<8x32xf32>
    %32 = vector.extract_strided_slice %29 {offsets = [0, 64], sizes = [8, 32], strides = [1, 1]} : vector<8x128xf32> to vector<8x32xf32>
    %33 = vector.extract_strided_slice %28 {offsets = [0, 96], sizes = [8, 32], strides = [1, 1]} : vector<8x128xf32> to vector<8x32xf32>
    %34 = arith.mulf %31, %17 : vector<8x32xf32>
    %35 = arith.mulf %30, %32 : vector<8x32xf32>
    %36 = arith.addf %34, %35 : vector<8x32xf32>
    %37 = math.tanh %36 : vector<8x32xf32>
    %38 = arith.mulf %33, %37 : vector<8x32xf32>
    %39 = arith.truncf %38 : vector<8x32xf32> to vector<8x32xbf16>
    %cst_21 = arith.constant dense<0.000000e+00> : vector<8x128xf32>
    %40 = tpu.matmul %39, %14, %cst_21 {dimension_numbers = #tpu.dot_dimension_numbers<[1], [0], [0], [1], [0, 0, 1, 1], [], []>} : vector<8x32xbf16>, vector<32x128xbf16>, vector<8x128xf32> -> vector<8x128xf32>
    %41 = vector.broadcast %15 : vector<1x128xf32> to vector<8x128xf32>
    %42 = arith.addf %40, %41 : vector<8x128xf32>
    %43 = arith.index_cast %c0_i32 : i32 to index
    %c0_22 = arith.constant 0 : index
    %c0_23 = arith.constant 0 : index
    %44 = vector.load %arg12[%43, %c0_22, %c0_23] : memref<8x8x128xf32, #tpu.memory_space<vmem>>, vector<1x8x128xf32>
    %45 = vector.shape_cast %44 : vector<1x8x128xf32> to vector<8x128xf32>
    %46 = vector.shape_cast %42 : vector<8x128xf32> to vector<1x8x128xf32>
    tpu.vector_store %arg12[%43, %c0_22, %c0_23], %46 {strides = array<i32>} : memref<8x8x128xf32, #tpu.memory_space<vmem>>, vector<1x8x128xf32>,
    %c1_i32 = arith.constant 1 : i32
    %47 = arith.index_cast %c1_i32 : i32 to index
    %c0_24 = arith.constant 0 : index
    %c0_25 = arith.constant 0 : index
    %48 = vector.load %arg11[%47, %c0_24, %c0_25] : memref<8x8x128xf32, #tpu.memory_space<vmem>>, vector<1x8x128xf32>
    %49 = vector.shape_cast %48 : vector<1x8x128xf32> to vector<8x128xf32>
    %50 = arith.truncf %38 : vector<8x32xf32> to vector<8x32xbf16>
    %cst_26 = arith.constant dense<0.000000e+00> : vector<8x128xf32>
    %51 = tpu.matmul %50, %12, %cst_26 {dimension_numbers = #tpu.dot_dimension_numbers<[1], [0], [0], [1], [0, 0, 1, 1], [], []>} : vector<8x32xbf16>, vector<32x128xbf16>, vector<8x128xf32> -> vector<8x128xf32>
    %52 = arith.addf %49, %51 : vector<8x128xf32>
    %53 = arith.negf %52 : vector<8x128xf32>
    %54 = math.exp %53 : vector<8x128xf32>
    %cst_27 = arith.constant 1.000000e+00 : f32
    %55 = vector.broadcast %cst_27 : f32 to vector<8x128xf32>
    %56 = arith.addf %55, %54 : vector<8x128xf32>
    %57 = arith.divf %55, %56 : vector<8x128xf32>
    %58 = math.tanh %52 : vector<8x128xf32>
    %59 = vector.extract_strided_slice %57 {offsets = [0, 0], sizes = [8, 32], strides = [1, 1]} : vector<8x128xf32> to vector<8x32xf32>
    %60 = vector.extract_strided_slice %57 {offsets = [0, 32], sizes = [8, 32], strides = [1, 1]} : vector<8x128xf32> to vector<8x32xf32>
    %61 = vector.extract_strided_slice %58 {offsets = [0, 64], sizes = [8, 32], strides = [1, 1]} : vector<8x128xf32> to vector<8x32xf32>
    %62 = vector.extract_strided_slice %57 {offsets = [0, 96], sizes = [8, 32], strides = [1, 1]} : vector<8x128xf32> to vector<8x32xf32>
    %63 = arith.mulf %60, %36 : vector<8x32xf32>
    %64 = arith.mulf %59, %61 : vector<8x32xf32>
    %65 = arith.addf %63, %64 : vector<8x32xf32>
    %66 = math.tanh %65 : vector<8x32xf32>
    %67 = arith.mulf %62, %66 : vector<8x32xf32>
    %68 = arith.truncf %67 : vector<8x32xf32> to vector<8x32xbf16>
    %cst_28 = arith.constant dense<0.000000e+00> : vector<8x128xf32>
    %69 = tpu.matmul %68, %14, %cst_28 {dimension_numbers = #tpu.dot_dimension_numbers<[1], [0], [0], [1], [0, 0, 1, 1], [], []>} : vector<8x32xbf16>, vector<32x128xbf16>, vector<8x128xf32> -> vector<8x128xf32>
    %70 = vector.broadcast %15 : vector<1x128xf32> to vector<8x128xf32>
    %71 = arith.addf %69, %70 : vector<8x128xf32>
    %72 = arith.index_cast %c1_i32 : i32 to index
    %c0_29 = arith.constant 0 : index
    %c0_30 = arith.constant 0 : index
    %73 = vector.load %arg12[%72, %c0_29, %c0_30] : memref<8x8x128xf32, #tpu.memory_space<vmem>>, vector<1x8x128xf32>
    %74 = vector.shape_cast %73 : vector<1x8x128xf32> to vector<8x128xf32>
    %75 = vector.shape_cast %71 : vector<8x128xf32> to vector<1x8x128xf32>
    tpu.vector_store %arg12[%72, %c0_29, %c0_30], %75 {strides = array<i32>} : memref<8x8x128xf32, #tpu.memory_space<vmem>>, vector<1x8x128xf32>,
    %c2_i32 = arith.constant 2 : i32
    %76 = arith.index_cast %c2_i32 : i32 to index
    %c0_31 = arith.constant 0 : index
    %c0_32 = arith.constant 0 : index
    %77 = vector.load %arg11[%76, %c0_31, %c0_32] : memref<8x8x128xf32, #tpu.memory_space<vmem>>, vector<1x8x128xf32>
    %78 = vector.shape_cast %77 : vector<1x8x128xf32> to vector<8x128xf32>
    %79 = arith.truncf %67 : vector<8x32xf32> to vector<8x32xbf16>
    %cst_33 = arith.constant dense<0.000000e+00> : vector<8x128xf32>
    %80 = tpu.matmul %79, %12, %cst_33 {dimension_numbers = #tpu.dot_dimension_numbers<[1], [0], [0], [1], [0, 0, 1, 1], [], []>} : vector<8x32xbf16>, vector<32x128xbf16>, vector<8x128xf32> -> vector<8x128xf32>
    %81 = arith.addf %78, %80 : vector<8x128xf32>
    %82 = arith.negf %81 : vector<8x128xf32>
    %83 = math.exp %82 : vector<8x128xf32>
    %cst_34 = arith.constant 1.000000e+00 : f32
    %84 = vector.broadcast %cst_34 : f32 to vector<8x128xf32>
    %85 = arith.addf %84, %83 : vector<8x128xf32>
    %86 = arith.divf %84, %85 : vector<8x128xf32>
    %87 = math.tanh %81 : vector<8x128xf32>
    %88 = vector.extract_strided_slice %86 {offsets = [0, 0], sizes = [8, 32], strides = [1, 1]} : vector<8x128xf32> to vector<8x32xf32>
    %89 = vector.extract_strided_slice %86 {offsets = [0, 32], sizes = [8, 32], strides = [1, 1]} : vector<8x128xf32> to vector<8x32xf32>
    %90 = vector.extract_strided_slice %87 {offsets = [0, 64], sizes = [8, 32], strides = [1, 1]} : vector<8x128xf32> to vector<8x32xf32>
    %91 = vector.extract_strided_slice %86 {offsets = [0, 96], sizes = [8, 32], strides = [1, 1]} : vector<8x128xf32> to vector<8x32xf32>
    %92 = arith.mulf %89, %65 : vector<8x32xf32>
    %93 = arith.mulf %88, %90 : vector<8x32xf32>
    %94 = arith.addf %92, %93 : vector<8x32xf32>
    %95 = math.tanh %94 : vector<8x32xf32>
    %96 = arith.mulf %91, %95 : vector<8x32xf32>
    %97 = arith.truncf %96 : vector<8x32xf32> to vector<8x32xbf16>
    %cst_35 = arith.constant dense<0.000000e+00> : vector<8x128xf32>
    %98 = tpu.matmul %97, %14, %cst_35 {dimension_numbers = #tpu.dot_dimension_numbers<[1], [0], [0], [1], [0, 0, 1, 1], [], []>} : vector<8x32xbf16>, vector<32x128xbf16>, vector<8x128xf32> -> vector<8x128xf32>
    %99 = vector.broadcast %15 : vector<1x128xf32> to vector<8x128xf32>
    %100 = arith.addf %98, %99 : vector<8x128xf32>
    %101 = arith.index_cast %c2_i32 : i32 to index
    %c0_36 = arith.constant 0 : index
    %c0_37 = arith.constant 0 : index
    %102 = vector.load %arg12[%101, %c0_36, %c0_37] : memref<8x8x128xf32, #tpu.memory_space<vmem>>, vector<1x8x128xf32>
    %103 = vector.shape_cast %102 : vector<1x8x128xf32> to vector<8x128xf32>
    %104 = vector.shape_cast %100 : vector<8x128xf32> to vector<1x8x128xf32>
    tpu.vector_store %arg12[%101, %c0_36, %c0_37], %104 {strides = array<i32>} : memref<8x8x128xf32, #tpu.memory_space<vmem>>, vector<1x8x128xf32>,
    %c3_i32 = arith.constant 3 : i32
    %105 = arith.index_cast %c3_i32 : i32 to index
    %c0_38 = arith.constant 0 : index
    %c0_39 = arith.constant 0 : index
    %106 = vector.load %arg11[%105, %c0_38, %c0_39] : memref<8x8x128xf32, #tpu.memory_space<vmem>>, vector<1x8x128xf32>
    %107 = vector.shape_cast %106 : vector<1x8x128xf32> to vector<8x128xf32>
    %108 = arith.truncf %96 : vector<8x32xf32> to vector<8x32xbf16>
    %cst_40 = arith.constant dense<0.000000e+00> : vector<8x128xf32>
    %109 = tpu.matmul %108, %12, %cst_40 {dimension_numbers = #tpu.dot_dimension_numbers<[1], [0], [0], [1], [0, 0, 1, 1], [], []>} : vector<8x32xbf16>, vector<32x128xbf16>, vector<8x128xf32> -> vector<8x128xf32>
    %110 = arith.addf %107, %109 : vector<8x128xf32>
    %111 = arith.negf %110 : vector<8x128xf32>
    %112 = math.exp %111 : vector<8x128xf32>
    %cst_41 = arith.constant 1.000000e+00 : f32
    %113 = vector.broadcast %cst_41 : f32 to vector<8x128xf32>
    %114 = arith.addf %113, %112 : vector<8x128xf32>
    %115 = arith.divf %113, %114 : vector<8x128xf32>
    %116 = math.tanh %110 : vector<8x128xf32>
    %117 = vector.extract_strided_slice %115 {offsets = [0, 0], sizes = [8, 32], strides = [1, 1]} : vector<8x128xf32> to vector<8x32xf32>
    %118 = vector.extract_strided_slice %115 {offsets = [0, 32], sizes = [8, 32], strides = [1, 1]} : vector<8x128xf32> to vector<8x32xf32>
    %119 = vector.extract_strided_slice %116 {offsets = [0, 64], sizes = [8, 32], strides = [1, 1]} : vector<8x128xf32> to vector<8x32xf32>
    %120 = vector.extract_strided_slice %115 {offsets = [0, 96], sizes = [8, 32], strides = [1, 1]} : vector<8x128xf32> to vector<8x32xf32>
    %121 = arith.mulf %118, %94 : vector<8x32xf32>
    %122 = arith.mulf %117, %119 : vector<8x32xf32>
    %123 = arith.addf %121, %122 : vector<8x32xf32>
    %124 = math.tanh %123 : vector<8x32xf32>
    %125 = arith.mulf %120, %124 : vector<8x32xf32>
    %126 = arith.truncf %125 : vector<8x32xf32> to vector<8x32xbf16>
    %cst_42 = arith.constant dense<0.000000e+00> : vector<8x128xf32>
    %127 = tpu.matmul %126, %14, %cst_42 {dimension_numbers = #tpu.dot_dimension_numbers<[1], [0], [0], [1], [0, 0, 1, 1], [], []>} : vector<8x32xbf16>, vector<32x128xbf16>, vector<8x128xf32> -> vector<8x128xf32>
    %128 = vector.broadcast %15 : vector<1x128xf32> to vector<8x128xf32>
    %129 = arith.addf %127, %128 : vector<8x128xf32>
    %130 = arith.index_cast %c3_i32 : i32 to index
    %c0_43 = arith.constant 0 : index
    %c0_44 = arith.constant 0 : index
    %131 = vector.load %arg12[%130, %c0_43, %c0_44] : memref<8x8x128xf32, #tpu.memory_space<vmem>>, vector<1x8x128xf32>
    %132 = vector.shape_cast %131 : vector<1x8x128xf32> to vector<8x128xf32>
    %133 = vector.shape_cast %129 : vector<8x128xf32> to vector<1x8x128xf32>
    tpu.vector_store %arg12[%130, %c0_43, %c0_44], %133 {strides = array<i32>} : memref<8x8x128xf32, #tpu.memory_space<vmem>>, vector<1x8x128xf32>,
    %c4_i32 = arith.constant 4 : i32
    %134 = arith.index_cast %c4_i32 : i32 to index
    %c0_45 = arith.constant 0 : index
    %c0_46 = arith.constant 0 : index
    %135 = vector.load %arg11[%134, %c0_45, %c0_46] : memref<8x8x128xf32, #tpu.memory_space<vmem>>, vector<1x8x128xf32>
    %136 = vector.shape_cast %135 : vector<1x8x128xf32> to vector<8x128xf32>
    %137 = arith.truncf %125 : vector<8x32xf32> to vector<8x32xbf16>
    %cst_47 = arith.constant dense<0.000000e+00> : vector<8x128xf32>
    %138 = tpu.matmul %137, %12, %cst_47 {dimension_numbers = #tpu.dot_dimension_numbers<[1], [0], [0], [1], [0, 0, 1, 1], [], []>} : vector<8x32xbf16>, vector<32x128xbf16>, vector<8x128xf32> -> vector<8x128xf32>
    %139 = arith.addf %136, %138 : vector<8x128xf32>
    %140 = arith.negf %139 : vector<8x128xf32>
    %141 = math.exp %140 : vector<8x128xf32>
    %cst_48 = arith.constant 1.000000e+00 : f32
    %142 = vector.broadcast %cst_48 : f32 to vector<8x128xf32>
    %143 = arith.addf %142, %141 : vector<8x128xf32>
    %144 = arith.divf %142, %143 : vector<8x128xf32>
    %145 = math.tanh %139 : vector<8x128xf32>
    %146 = vector.extract_strided_slice %144 {offsets = [0, 0], sizes = [8, 32], strides = [1, 1]} : vector<8x128xf32> to vector<8x32xf32>
    %147 = vector.extract_strided_slice %144 {offsets = [0, 32], sizes = [8, 32], strides = [1, 1]} : vector<8x128xf32> to vector<8x32xf32>
    %148 = vector.extract_strided_slice %145 {offsets = [0, 64], sizes = [8, 32], strides = [1, 1]} : vector<8x128xf32> to vector<8x32xf32>
    %149 = vector.extract_strided_slice %144 {offsets = [0, 96], sizes = [8, 32], strides = [1, 1]} : vector<8x128xf32> to vector<8x32xf32>
    %150 = arith.mulf %147, %123 : vector<8x32xf32>
    %151 = arith.mulf %146, %148 : vector<8x32xf32>
    %152 = arith.addf %150, %151 : vector<8x32xf32>
    %153 = math.tanh %152 : vector<8x32xf32>
    %154 = arith.mulf %149, %153 : vector<8x32xf32>
    %155 = arith.truncf %154 : vector<8x32xf32> to vector<8x32xbf16>
    %cst_49 = arith.constant dense<0.000000e+00> : vector<8x128xf32>
    %156 = tpu.matmul %155, %14, %cst_49 {dimension_numbers = #tpu.dot_dimension_numbers<[1], [0], [0], [1], [0, 0, 1, 1], [], []>} : vector<8x32xbf16>, vector<32x128xbf16>, vector<8x128xf32> -> vector<8x128xf32>
    %157 = vector.broadcast %15 : vector<1x128xf32> to vector<8x128xf32>
    %158 = arith.addf %156, %157 : vector<8x128xf32>
    %159 = arith.index_cast %c4_i32 : i32 to index
    %c0_50 = arith.constant 0 : index
    %c0_51 = arith.constant 0 : index
    %160 = vector.load %arg12[%159, %c0_50, %c0_51] : memref<8x8x128xf32, #tpu.memory_space<vmem>>, vector<1x8x128xf32>
    %161 = vector.shape_cast %160 : vector<1x8x128xf32> to vector<8x128xf32>
    %162 = vector.shape_cast %158 : vector<8x128xf32> to vector<1x8x128xf32>
    tpu.vector_store %arg12[%159, %c0_50, %c0_51], %162 {strides = array<i32>} : memref<8x8x128xf32, #tpu.memory_space<vmem>>, vector<1x8x128xf32>,
    %c5_i32 = arith.constant 5 : i32
    %163 = arith.index_cast %c5_i32 : i32 to index
    %c0_52 = arith.constant 0 : index
    %c0_53 = arith.constant 0 : index
    %164 = vector.load %arg11[%163, %c0_52, %c0_53] : memref<8x8x128xf32, #tpu.memory_space<vmem>>, vector<1x8x128xf32>
    %165 = vector.shape_cast %164 : vector<1x8x128xf32> to vector<8x128xf32>
    %166 = arith.truncf %154 : vector<8x32xf32> to vector<8x32xbf16>
    %cst_54 = arith.constant dense<0.000000e+00> : vector<8x128xf32>
    %167 = tpu.matmul %166, %12, %cst_54 {dimension_numbers = #tpu.dot_dimension_numbers<[1], [0], [0], [1], [0, 0, 1, 1], [], []>} : vector<8x32xbf16>, vector<32x128xbf16>, vector<8x128xf32> -> vector<8x128xf32>
    %168 = arith.addf %165, %167 : vector<8x128xf32>
    %169 = arith.negf %168 : vector<8x128xf32>
    %170 = math.exp %169 : vector<8x128xf32>
    %cst_55 = arith.constant 1.000000e+00 : f32
    %171 = vector.broadcast %cst_55 : f32 to vector<8x128xf32>
    %172 = arith.addf %171, %170 : vector<8x128xf32>
    %173 = arith.divf %171, %172 : vector<8x128xf32>
    %174 = math.tanh %168 : vector<8x128xf32>
    %175 = vector.extract_strided_slice %173 {offsets = [0, 0], sizes = [8, 32], strides = [1, 1]} : vector<8x128xf32> to vector<8x32xf32>
    %176 = vector.extract_strided_slice %173 {offsets = [0, 32], sizes = [8, 32], strides = [1, 1]} : vector<8x128xf32> to vector<8x32xf32>
    %177 = vector.extract_strided_slice %174 {offsets = [0, 64], sizes = [8, 32], strides = [1, 1]} : vector<8x128xf32> to vector<8x32xf32>
    %178 = vector.extract_strided_slice %173 {offsets = [0, 96], sizes = [8, 32], strides = [1, 1]} : vector<8x128xf32> to vector<8x32xf32>
    %179 = arith.mulf %176, %152 : vector<8x32xf32>
    %180 = arith.mulf %175, %177 : vector<8x32xf32>
    %181 = arith.addf %179, %180 : vector<8x32xf32>
    %182 = math.tanh %181 : vector<8x32xf32>
    %183 = arith.mulf %178, %182 : vector<8x32xf32>
    %184 = arith.truncf %183 : vector<8x32xf32> to vector<8x32xbf16>
    %cst_56 = arith.constant dense<0.000000e+00> : vector<8x128xf32>
    %185 = tpu.matmul %184, %14, %cst_56 {dimension_numbers = #tpu.dot_dimension_numbers<[1], [0], [0], [1], [0, 0, 1, 1], [], []>} : vector<8x32xbf16>, vector<32x128xbf16>, vector<8x128xf32> -> vector<8x128xf32>
    %186 = vector.broadcast %15 : vector<1x128xf32> to vector<8x128xf32>
    %187 = arith.addf %185, %186 : vector<8x128xf32>
    %188 = arith.index_cast %c5_i32 : i32 to index
    %c0_57 = arith.constant 0 : index
    %c0_58 = arith.constant 0 : index
    %189 = vector.load %arg12[%188, %c0_57, %c0_58] : memref<8x8x128xf32, #tpu.memory_space<vmem>>, vector<1x8x128xf32>
    %190 = vector.shape_cast %189 : vector<1x8x128xf32> to vector<8x128xf32>
    %191 = vector.shape_cast %187 : vector<8x128xf32> to vector<1x8x128xf32>
    tpu.vector_store %arg12[%188, %c0_57, %c0_58], %191 {strides = array<i32>} : memref<8x8x128xf32, #tpu.memory_space<vmem>>, vector<1x8x128xf32>,
    %c6_i32 = arith.constant 6 : i32
    %192 = arith.index_cast %c6_i32 : i32 to index
    %c0_59 = arith.constant 0 : index
    %c0_60 = arith.constant 0 : index
    %193 = vector.load %arg11[%192, %c0_59, %c0_60] : memref<8x8x128xf32, #tpu.memory_space<vmem>>, vector<1x8x128xf32>
    %194 = vector.shape_cast %193 : vector<1x8x128xf32> to vector<8x128xf32>
    %195 = arith.truncf %183 : vector<8x32xf32> to vector<8x32xbf16>
    %cst_61 = arith.constant dense<0.000000e+00> : vector<8x128xf32>
    %196 = tpu.matmul %195, %12, %cst_61 {dimension_numbers = #tpu.dot_dimension_numbers<[1], [0], [0], [1], [0, 0, 1, 1], [], []>} : vector<8x32xbf16>, vector<32x128xbf16>, vector<8x128xf32> -> vector<8x128xf32>
    %197 = arith.addf %194, %196 : vector<8x128xf32>
    %198 = arith.negf %197 : vector<8x128xf32>
    %199 = math.exp %198 : vector<8x128xf32>
    %cst_62 = arith.constant 1.000000e+00 : f32
    %200 = vector.broadcast %cst_62 : f32 to vector<8x128xf32>
    %201 = arith.addf %200, %199 : vector<8x128xf32>
    %202 = arith.divf %200, %201 : vector<8x128xf32>
    %203 = math.tanh %197 : vector<8x128xf32>
    %204 = vector.extract_strided_slice %202 {offsets = [0, 0], sizes = [8, 32], strides = [1, 1]} : vector<8x128xf32> to vector<8x32xf32>
    %205 = vector.extract_strided_slice %202 {offsets = [0, 32], sizes = [8, 32], strides = [1, 1]} : vector<8x128xf32> to vector<8x32xf32>
    %206 = vector.extract_strided_slice %203 {offsets = [0, 64], sizes = [8, 32], strides = [1, 1]} : vector<8x128xf32> to vector<8x32xf32>
    %207 = vector.extract_strided_slice %202 {offsets = [0, 96], sizes = [8, 32], strides = [1, 1]} : vector<8x128xf32> to vector<8x32xf32>
    %208 = arith.mulf %205, %181 : vector<8x32xf32>
    %209 = arith.mulf %204, %206 : vector<8x32xf32>
    %210 = arith.addf %208, %209 : vector<8x32xf32>
    %211 = math.tanh %210 : vector<8x32xf32>
    %212 = arith.mulf %207, %211 : vector<8x32xf32>
    %213 = arith.truncf %212 : vector<8x32xf32> to vector<8x32xbf16>
    %cst_63 = arith.constant dense<0.000000e+00> : vector<8x128xf32>
    %214 = tpu.matmul %213, %14, %cst_63 {dimension_numbers = #tpu.dot_dimension_numbers<[1], [0], [0], [1], [0, 0, 1, 1], [], []>} : vector<8x32xbf16>, vector<32x128xbf16>, vector<8x128xf32> -> vector<8x128xf32>
    %215 = vector.broadcast %15 : vector<1x128xf32> to vector<8x128xf32>
    %216 = arith.addf %214, %215 : vector<8x128xf32>
    %217 = arith.index_cast %c6_i32 : i32 to index
    %c0_64 = arith.constant 0 : index
    %c0_65 = arith.constant 0 : index
    %218 = vector.load %arg12[%217, %c0_64, %c0_65] : memref<8x8x128xf32, #tpu.memory_space<vmem>>, vector<1x8x128xf32>
    %219 = vector.shape_cast %218 : vector<1x8x128xf32> to vector<8x128xf32>
    %220 = vector.shape_cast %216 : vector<8x128xf32> to vector<1x8x128xf32>
    tpu.vector_store %arg12[%217, %c0_64, %c0_65], %220 {strides = array<i32>} : memref<8x8x128xf32, #tpu.memory_space<vmem>>, vector<1x8x128xf32>,
    %c7_i32 = arith.constant 7 : i32
    %221 = arith.index_cast %c7_i32 : i32 to index
    %c0_66 = arith.constant 0 : index
    %c0_67 = arith.constant 0 : index
    %222 = vector.load %arg11[%221, %c0_66, %c0_67] : memref<8x8x128xf32, #tpu.memory_space<vmem>>, vector<1x8x128xf32>
    %223 = vector.shape_cast %222 : vector<1x8x128xf32> to vector<8x128xf32>
    %224 = arith.truncf %212 : vector<8x32xf32> to vector<8x32xbf16>
    %cst_68 = arith.constant dense<0.000000e+00> : vector<8x128xf32>
    %225 = tpu.matmul %224, %12, %cst_68 {dimension_numbers = #tpu.dot_dimension_numbers<[1], [0], [0], [1], [0, 0, 1, 1], [], []>} : vector<8x32xbf16>, vector<32x128xbf16>, vector<8x128xf32> -> vector<8x128xf32>
    %226 = arith.addf %223, %225 : vector<8x128xf32>
    %227 = arith.negf %226 : vector<8x128xf32>
    %228 = math.exp %227 : vector<8x128xf32>
    %cst_69 = arith.constant 1.000000e+00 : f32
    %229 = vector.broadcast %cst_69 : f32 to vector<8x128xf32>
    %230 = arith.addf %229, %228 : vector<8x128xf32>
    %231 = arith.divf %229, %230 : vector<8x128xf32>
    %232 = math.tanh %226 : vector<8x128xf32>
    %233 = vector.extract_strided_slice %231 {offsets = [0, 0], sizes = [8, 32], strides = [1, 1]} : vector<8x128xf32> to vector<8x32xf32>
    %234 = vector.extract_strided_slice %231 {offsets = [0, 32], sizes = [8, 32], strides = [1, 1]} : vector<8x128xf32> to vector<8x32xf32>
    %235 = vector.extract_strided_slice %232 {offsets = [0, 64], sizes = [8, 32], strides = [1, 1]} : vector<8x128xf32> to vector<8x32xf32>
    %236 = vector.extract_strided_slice %231 {offsets = [0, 96], sizes = [8, 32], strides = [1, 1]} : vector<8x128xf32> to vector<8x32xf32>
    %237 = arith.mulf %234, %210 : vector<8x32xf32>
    %238 = arith.mulf %233, %235 : vector<8x32xf32>
    %239 = arith.addf %237, %238 : vector<8x32xf32>
    %240 = math.tanh %239 : vector<8x32xf32>
    %241 = arith.mulf %236, %240 : vector<8x32xf32>
    %242 = arith.truncf %241 : vector<8x32xf32> to vector<8x32xbf16>
    %cst_70 = arith.constant dense<0.000000e+00> : vector<8x128xf32>
    %243 = tpu.matmul %242, %14, %cst_70 {dimension_numbers = #tpu.dot_dimension_numbers<[1], [0], [0], [1], [0, 0, 1, 1], [], []>} : vector<8x32xbf16>, vector<32x128xbf16>, vector<8x128xf32> -> vector<8x128xf32>
    %244 = vector.broadcast %15 : vector<1x128xf32> to vector<8x128xf32>
    %245 = arith.addf %243, %244 : vector<8x128xf32>
    %246 = arith.index_cast %c7_i32 : i32 to index
    %c0_71 = arith.constant 0 : index
    %c0_72 = arith.constant 0 : index
    %247 = vector.load %arg12[%246, %c0_71, %c0_72] : memref<8x8x128xf32, #tpu.memory_space<vmem>>, vector<1x8x128xf32>
    %248 = vector.shape_cast %247 : vector<1x8x128xf32> to vector<8x128xf32>
    %249 = vector.shape_cast %245 : vector<8x128xf32> to vector<1x8x128xf32>
    tpu.vector_store %arg12[%246, %c0_71, %c0_72], %249 {strides = array<i32>} : memref<8x8x128xf32, #tpu.memory_space<vmem>>, vector<1x8x128xf32>,
    %c8_i32 = arith.constant 8 : i32
    %c0_73 = arith.constant 0 : index
    %c0_74 = arith.constant 0 : index
    %250 = vector.load %arg6[%c0_73, %c0_74] : memref<32x128xf32, #tpu.memory_space<vmem>>, vector<32x128xf32>
    %251 = arith.truncf %250 : vector<32x128xf32> to vector<32x128xbf16>
    %cst_75 = arith.constant 0.000000e+00 : f32
    %252 = vector.broadcast %cst_75 : f32 to vector<8x32xf32>
    %cst_76 = arith.constant 0.000000e+00 : f32
    %253 = vector.broadcast %cst_76 : f32 to vector<8x32xf32>
    %c0_i32_77 = arith.constant 0 : i32
    %254 = arith.index_cast %c0_i32_77 : i32 to index
    %c0_78 = arith.constant 0 : index
    %c0_79 = arith.constant 0 : index
    %255 = vector.load %arg12[%254, %c0_78, %c0_79] : memref<8x8x128xf32, #tpu.memory_space<vmem>>, vector<1x8x128xf32>
    %256 = vector.shape_cast %255 : vector<1x8x128xf32> to vector<8x128xf32>
    %257 = arith.truncf %252 : vector<8x32xf32> to vector<8x32xbf16>
    %cst_80 = arith.constant dense<0.000000e+00> : vector<8x128xf32>
    %258 = tpu.matmul %257, %251, %cst_80 {dimension_numbers = #tpu.dot_dimension_numbers<[1], [0], [0], [1], [0, 0, 1, 1], [], []>} : vector<8x32xbf16>, vector<32x128xbf16>, vector<8x128xf32> -> vector<8x128xf32>
    %259 = arith.addf %256, %258 : vector<8x128xf32>
    %260 = arith.negf %259 : vector<8x128xf32>
    %261 = math.exp %260 : vector<8x128xf32>
    %cst_81 = arith.constant 1.000000e+00 : f32
    %262 = vector.broadcast %cst_81 : f32 to vector<8x128xf32>
    %263 = arith.addf %262, %261 : vector<8x128xf32>
    %264 = arith.divf %262, %263 : vector<8x128xf32>
    %265 = math.tanh %259 : vector<8x128xf32>
    %266 = vector.extract_strided_slice %264 {offsets = [0, 0], sizes = [8, 32], strides = [1, 1]} : vector<8x128xf32> to vector<8x32xf32>
    %267 = vector.extract_strided_slice %264 {offsets = [0, 32], sizes = [8, 32], strides = [1, 1]} : vector<8x128xf32> to vector<8x32xf32>
    %268 = vector.extract_strided_slice %265 {offsets = [0, 64], sizes = [8, 32], strides = [1, 1]} : vector<8x128xf32> to vector<8x32xf32>
    %269 = vector.extract_strided_slice %264 {offsets = [0, 96], sizes = [8, 32], strides = [1, 1]} : vector<8x128xf32> to vector<8x32xf32>
    %270 = arith.mulf %267, %253 : vector<8x32xf32>
    %271 = arith.mulf %266, %268 : vector<8x32xf32>
    %272 = arith.addf %270, %271 : vector<8x32xf32>
    %273 = math.tanh %272 : vector<8x32xf32>
    %274 = arith.mulf %269, %273 : vector<8x32xf32>
    %c1_i32_82 = arith.constant 1 : i32
    %275 = arith.index_cast %c1_i32_82 : i32 to index
    %c0_83 = arith.constant 0 : index
    %c0_84 = arith.constant 0 : index
    %276 = vector.load %arg12[%275, %c0_83, %c0_84] : memref<8x8x128xf32, #tpu.memory_space<vmem>>, vector<1x8x128xf32>
    %277 = vector.shape_cast %276 : vector<1x8x128xf32> to vector<8x128xf32>
    %278 = arith.truncf %274 : vector<8x32xf32> to vector<8x32xbf16>
    %cst_85 = arith.constant dense<0.000000e+00> : vector<8x128xf32>
    %279 = tpu.matmul %278, %251, %cst_85 {dimension_numbers = #tpu.dot_dimension_numbers<[1], [0], [0], [1], [0, 0, 1, 1], [], []>} : vector<8x32xbf16>, vector<32x128xbf16>, vector<8x128xf32> -> vector<8x128xf32>
    %280 = arith.addf %277, %279 : vector<8x128xf32>
    %281 = arith.negf %280 : vector<8x128xf32>
    %282 = math.exp %281 : vector<8x128xf32>
    %cst_86 = arith.constant 1.000000e+00 : f32
    %283 = vector.broadcast %cst_86 : f32 to vector<8x128xf32>
    %284 = arith.addf %283, %282 : vector<8x128xf32>
    %285 = arith.divf %283, %284 : vector<8x128xf32>
    %286 = math.tanh %280 : vector<8x128xf32>
    %287 = vector.extract_strided_slice %285 {offsets = [0, 0], sizes = [8, 32], strides = [1, 1]} : vector<8x128xf32> to vector<8x32xf32>
    %288 = vector.extract_strided_slice %285 {offsets = [0, 32], sizes = [8, 32], strides = [1, 1]} : vector<8x128xf32> to vector<8x32xf32>
    %289 = vector.extract_strided_slice %286 {offsets = [0, 64], sizes = [8, 32], strides = [1, 1]} : vector<8x128xf32> to vector<8x32xf32>
    %290 = vector.extract_strided_slice %285 {offsets = [0, 96], sizes = [8, 32], strides = [1, 1]} : vector<8x128xf32> to vector<8x32xf32>
    %291 = arith.mulf %288, %272 : vector<8x32xf32>
    %292 = arith.mulf %287, %289 : vector<8x32xf32>
    %293 = arith.addf %291, %292 : vector<8x32xf32>
    %294 = math.tanh %293 : vector<8x32xf32>
    %295 = arith.mulf %290, %294 : vector<8x32xf32>
    %c2_i32_87 = arith.constant 2 : i32
    %296 = arith.index_cast %c2_i32_87 : i32 to index
    %c0_88 = arith.constant 0 : index
    %c0_89 = arith.constant 0 : index
    %297 = vector.load %arg12[%296, %c0_88, %c0_89] : memref<8x8x128xf32, #tpu.memory_space<vmem>>, vector<1x8x128xf32>
    %298 = vector.shape_cast %297 : vector<1x8x128xf32> to vector<8x128xf32>
    %299 = arith.truncf %295 : vector<8x32xf32> to vector<8x32xbf16>
    %cst_90 = arith.constant dense<0.000000e+00> : vector<8x128xf32>
    %300 = tpu.matmul %299, %251, %cst_90 {dimension_numbers = #tpu.dot_dimension_numbers<[1], [0], [0], [1], [0, 0, 1, 1], [], []>} : vector<8x32xbf16>, vector<32x128xbf16>, vector<8x128xf32> -> vector<8x128xf32>
    %301 = arith.addf %298, %300 : vector<8x128xf32>
    %302 = arith.negf %301 : vector<8x128xf32>
    %303 = math.exp %302 : vector<8x128xf32>
    %cst_91 = arith.constant 1.000000e+00 : f32
    %304 = vector.broadcast %cst_91 : f32 to vector<8x128xf32>
    %305 = arith.addf %304, %303 : vector<8x128xf32>
    %306 = arith.divf %304, %305 : vector<8x128xf32>
    %307 = math.tanh %301 : vector<8x128xf32>
    %308 = vector.extract_strided_slice %306 {offsets = [0, 0], sizes = [8, 32], strides = [1, 1]} : vector<8x128xf32> to vector<8x32xf32>
    %309 = vector.extract_strided_slice %306 {offsets = [0, 32], sizes = [8, 32], strides = [1, 1]} : vector<8x128xf32> to vector<8x32xf32>
    %310 = vector.extract_strided_slice %307 {offsets = [0, 64], sizes = [8, 32], strides = [1, 1]} : vector<8x128xf32> to vector<8x32xf32>
    %311 = vector.extract_strided_slice %306 {offsets = [0, 96], sizes = [8, 32], strides = [1, 1]} : vector<8x128xf32> to vector<8x32xf32>
    %312 = arith.mulf %309, %293 : vector<8x32xf32>
    %313 = arith.mulf %308, %310 : vector<8x32xf32>
    %314 = arith.addf %312, %313 : vector<8x32xf32>
    %315 = math.tanh %314 : vector<8x32xf32>
    %316 = arith.mulf %311, %315 : vector<8x32xf32>
    %c3_i32_92 = arith.constant 3 : i32
    %317 = arith.index_cast %c3_i32_92 : i32 to index
    %c0_93 = arith.constant 0 : index
    %c0_94 = arith.constant 0 : index
    %318 = vector.load %arg12[%317, %c0_93, %c0_94] : memref<8x8x128xf32, #tpu.memory_space<vmem>>, vector<1x8x128xf32>
    %319 = vector.shape_cast %318 : vector<1x8x128xf32> to vector<8x128xf32>
    %320 = arith.truncf %316 : vector<8x32xf32> to vector<8x32xbf16>
    %cst_95 = arith.constant dense<0.000000e+00> : vector<8x128xf32>
    %321 = tpu.matmul %320, %251, %cst_95 {dimension_numbers = #tpu.dot_dimension_numbers<[1], [0], [0], [1], [0, 0, 1, 1], [], []>} : vector<8x32xbf16>, vector<32x128xbf16>, vector<8x128xf32> -> vector<8x128xf32>
    %322 = arith.addf %319, %321 : vector<8x128xf32>
    %323 = arith.negf %322 : vector<8x128xf32>
    %324 = math.exp %323 : vector<8x128xf32>
    %cst_96 = arith.constant 1.000000e+00 : f32
    %325 = vector.broadcast %cst_96 : f32 to vector<8x128xf32>
    %326 = arith.addf %325, %324 : vector<8x128xf32>
    %327 = arith.divf %325, %326 : vector<8x128xf32>
    %328 = math.tanh %322 : vector<8x128xf32>
    %329 = vector.extract_strided_slice %327 {offsets = [0, 0], sizes = [8, 32], strides = [1, 1]} : vector<8x128xf32> to vector<8x32xf32>
    %330 = vector.extract_strided_slice %327 {offsets = [0, 32], sizes = [8, 32], strides = [1, 1]} : vector<8x128xf32> to vector<8x32xf32>
    %331 = vector.extract_strided_slice %328 {offsets = [0, 64], sizes = [8, 32], strides = [1, 1]} : vector<8x128xf32> to vector<8x32xf32>
    %332 = vector.extract_strided_slice %327 {offsets = [0, 96], sizes = [8, 32], strides = [1, 1]} : vector<8x128xf32> to vector<8x32xf32>
    %333 = arith.mulf %330, %314 : vector<8x32xf32>
    %334 = arith.mulf %329, %331 : vector<8x32xf32>
    %335 = arith.addf %333, %334 : vector<8x32xf32>
    %336 = math.tanh %335 : vector<8x32xf32>
    %337 = arith.mulf %332, %336 : vector<8x32xf32>
    %c4_i32_97 = arith.constant 4 : i32
    %338 = arith.index_cast %c4_i32_97 : i32 to index
    %c0_98 = arith.constant 0 : index
    %c0_99 = arith.constant 0 : index
    %339 = vector.load %arg12[%338, %c0_98, %c0_99] : memref<8x8x128xf32, #tpu.memory_space<vmem>>, vector<1x8x128xf32>
    %340 = vector.shape_cast %339 : vector<1x8x128xf32> to vector<8x128xf32>
    %341 = arith.truncf %337 : vector<8x32xf32> to vector<8x32xbf16>
    %cst_100 = arith.constant dense<0.000000e+00> : vector<8x128xf32>
    %342 = tpu.matmul %341, %251, %cst_100 {dimension_numbers = #tpu.dot_dimension_numbers<[1], [0], [0], [1], [0, 0, 1, 1], [], []>} : vector<8x32xbf16>, vector<32x128xbf16>, vector<8x128xf32> -> vector<8x128xf32>
    %343 = arith.addf %340, %342 : vector<8x128xf32>
    %344 = arith.negf %343 : vector<8x128xf32>
    %345 = math.exp %344 : vector<8x128xf32>
    %cst_101 = arith.constant 1.000000e+00 : f32
    %346 = vector.broadcast %cst_101 : f32 to vector<8x128xf32>
    %347 = arith.addf %346, %345 : vector<8x128xf32>
    %348 = arith.divf %346, %347 : vector<8x128xf32>
    %349 = math.tanh %343 : vector<8x128xf32>
    %350 = vector.extract_strided_slice %348 {offsets = [0, 0], sizes = [8, 32], strides = [1, 1]} : vector<8x128xf32> to vector<8x32xf32>
    %351 = vector.extract_strided_slice %348 {offsets = [0, 32], sizes = [8, 32], strides = [1, 1]} : vector<8x128xf32> to vector<8x32xf32>
    %352 = vector.extract_strided_slice %349 {offsets = [0, 64], sizes = [8, 32], strides = [1, 1]} : vector<8x128xf32> to vector<8x32xf32>
    %353 = vector.extract_strided_slice %348 {offsets = [0, 96], sizes = [8, 32], strides = [1, 1]} : vector<8x128xf32> to vector<8x32xf32>
    %354 = arith.mulf %351, %335 : vector<8x32xf32>
    %355 = arith.mulf %350, %352 : vector<8x32xf32>
    %356 = arith.addf %354, %355 : vector<8x32xf32>
    %357 = math.tanh %356 : vector<8x32xf32>
    %358 = arith.mulf %353, %357 : vector<8x32xf32>
    %c5_i32_102 = arith.constant 5 : i32
    %359 = arith.index_cast %c5_i32_102 : i32 to index
    %c0_103 = arith.constant 0 : index
    %c0_104 = arith.constant 0 : index
    %360 = vector.load %arg12[%359, %c0_103, %c0_104] : memref<8x8x128xf32, #tpu.memory_space<vmem>>, vector<1x8x128xf32>
    %361 = vector.shape_cast %360 : vector<1x8x128xf32> to vector<8x128xf32>
    %362 = arith.truncf %358 : vector<8x32xf32> to vector<8x32xbf16>
    %cst_105 = arith.constant dense<0.000000e+00> : vector<8x128xf32>
    %363 = tpu.matmul %362, %251, %cst_105 {dimension_numbers = #tpu.dot_dimension_numbers<[1], [0], [0], [1], [0, 0, 1, 1], [], []>} : vector<8x32xbf16>, vector<32x128xbf16>, vector<8x128xf32> -> vector<8x128xf32>
    %364 = arith.addf %361, %363 : vector<8x128xf32>
    %365 = arith.negf %364 : vector<8x128xf32>
    %366 = math.exp %365 : vector<8x128xf32>
    %cst_106 = arith.constant 1.000000e+00 : f32
    %367 = vector.broadcast %cst_106 : f32 to vector<8x128xf32>
    %368 = arith.addf %367, %366 : vector<8x128xf32>
    %369 = arith.divf %367, %368 : vector<8x128xf32>
    %370 = math.tanh %364 : vector<8x128xf32>
    %371 = vector.extract_strided_slice %369 {offsets = [0, 0], sizes = [8, 32], strides = [1, 1]} : vector<8x128xf32> to vector<8x32xf32>
    %372 = vector.extract_strided_slice %369 {offsets = [0, 32], sizes = [8, 32], strides = [1, 1]} : vector<8x128xf32> to vector<8x32xf32>
    %373 = vector.extract_strided_slice %370 {offsets = [0, 64], sizes = [8, 32], strides = [1, 1]} : vector<8x128xf32> to vector<8x32xf32>
    %374 = vector.extract_strided_slice %369 {offsets = [0, 96], sizes = [8, 32], strides = [1, 1]} : vector<8x128xf32> to vector<8x32xf32>
    %375 = arith.mulf %372, %356 : vector<8x32xf32>
    %376 = arith.mulf %371, %373 : vector<8x32xf32>
    %377 = arith.addf %375, %376 : vector<8x32xf32>
    %378 = math.tanh %377 : vector<8x32xf32>
    %379 = arith.mulf %374, %378 : vector<8x32xf32>
    %c6_i32_107 = arith.constant 6 : i32
    %380 = arith.index_cast %c6_i32_107 : i32 to index
    %c0_108 = arith.constant 0 : index
    %c0_109 = arith.constant 0 : index
    %381 = vector.load %arg12[%380, %c0_108, %c0_109] : memref<8x8x128xf32, #tpu.memory_space<vmem>>, vector<1x8x128xf32>
    %382 = vector.shape_cast %381 : vector<1x8x128xf32> to vector<8x128xf32>
    %383 = arith.truncf %379 : vector<8x32xf32> to vector<8x32xbf16>
    %cst_110 = arith.constant dense<0.000000e+00> : vector<8x128xf32>
    %384 = tpu.matmul %383, %251, %cst_110 {dimension_numbers = #tpu.dot_dimension_numbers<[1], [0], [0], [1], [0, 0, 1, 1], [], []>} : vector<8x32xbf16>, vector<32x128xbf16>, vector<8x128xf32> -> vector<8x128xf32>
    %385 = arith.addf %382, %384 : vector<8x128xf32>
    %386 = arith.negf %385 : vector<8x128xf32>
    %387 = math.exp %386 : vector<8x128xf32>
    %cst_111 = arith.constant 1.000000e+00 : f32
    %388 = vector.broadcast %cst_111 : f32 to vector<8x128xf32>
    %389 = arith.addf %388, %387 : vector<8x128xf32>
    %390 = arith.divf %388, %389 : vector<8x128xf32>
    %391 = math.tanh %385 : vector<8x128xf32>
    %392 = vector.extract_strided_slice %390 {offsets = [0, 0], sizes = [8, 32], strides = [1, 1]} : vector<8x128xf32> to vector<8x32xf32>
    %393 = vector.extract_strided_slice %390 {offsets = [0, 32], sizes = [8, 32], strides = [1, 1]} : vector<8x128xf32> to vector<8x32xf32>
    %394 = vector.extract_strided_slice %391 {offsets = [0, 64], sizes = [8, 32], strides = [1, 1]} : vector<8x128xf32> to vector<8x32xf32>
    %395 = vector.extract_strided_slice %390 {offsets = [0, 96], sizes = [8, 32], strides = [1, 1]} : vector<8x128xf32> to vector<8x32xf32>
    %396 = arith.mulf %393, %377 : vector<8x32xf32>
    %397 = arith.mulf %392, %394 : vector<8x32xf32>
    %398 = arith.addf %396, %397 : vector<8x32xf32>
    %399 = math.tanh %398 : vector<8x32xf32>
    %400 = arith.mulf %395, %399 : vector<8x32xf32>
    %c7_i32_112 = arith.constant 7 : i32
    %401 = arith.index_cast %c7_i32_112 : i32 to index
    %c0_113 = arith.constant 0 : index
    %c0_114 = arith.constant 0 : index
    %402 = vector.load %arg12[%401, %c0_113, %c0_114] : memref<8x8x128xf32, #tpu.memory_space<vmem>>, vector<1x8x128xf32>
    %403 = vector.shape_cast %402 : vector<1x8x128xf32> to vector<8x128xf32>
    %404 = arith.truncf %400 : vector<8x32xf32> to vector<8x32xbf16>
    %cst_115 = arith.constant dense<0.000000e+00> : vector<8x128xf32>
    %405 = tpu.matmul %404, %251, %cst_115 {dimension_numbers = #tpu.dot_dimension_numbers<[1], [0], [0], [1], [0, 0, 1, 1], [], []>} : vector<8x32xbf16>, vector<32x128xbf16>, vector<8x128xf32> -> vector<8x128xf32>
    %406 = arith.addf %403, %405 : vector<8x128xf32>
    %407 = arith.negf %406 : vector<8x128xf32>
    %408 = math.exp %407 : vector<8x128xf32>
    %cst_116 = arith.constant 1.000000e+00 : f32
    %409 = vector.broadcast %cst_116 : f32 to vector<8x128xf32>
    %410 = arith.addf %409, %408 : vector<8x128xf32>
    %411 = arith.divf %409, %410 : vector<8x128xf32>
    %412 = math.tanh %406 : vector<8x128xf32>
    %413 = vector.extract_strided_slice %411 {offsets = [0, 0], sizes = [8, 32], strides = [1, 1]} : vector<8x128xf32> to vector<8x32xf32>
    %414 = vector.extract_strided_slice %411 {offsets = [0, 32], sizes = [8, 32], strides = [1, 1]} : vector<8x128xf32> to vector<8x32xf32>
    %415 = vector.extract_strided_slice %412 {offsets = [0, 64], sizes = [8, 32], strides = [1, 1]} : vector<8x128xf32> to vector<8x32xf32>
    %416 = vector.extract_strided_slice %411 {offsets = [0, 96], sizes = [8, 32], strides = [1, 1]} : vector<8x128xf32> to vector<8x32xf32>
    %417 = arith.mulf %414, %398 : vector<8x32xf32>
    %418 = arith.mulf %413, %415 : vector<8x32xf32>
    %419 = arith.addf %417, %418 : vector<8x32xf32>
    %420 = math.tanh %419 : vector<8x32xf32>
    %421 = arith.mulf %416, %420 : vector<8x32xf32>
    %c8_i32_117 = arith.constant 8 : i32
    %422 = arith.truncf %421 : vector<8x32xf32> to vector<8x32xbf16>
    %c0_118 = arith.constant 0 : index
    %c0_119 = arith.constant 0 : index
    %423 = vector.load %arg8[%c0_118, %c0_119] : memref<32x8xf32, #tpu.memory_space<vmem>>, vector<32x8xf32>
    %424 = arith.truncf %423 : vector<32x8xf32> to vector<32x8xbf16>
    %cst_120 = arith.constant dense<0.000000e+00> : vector<8x8xf32>
    %425 = tpu.matmul %422, %424, %cst_120 {dimension_numbers = #tpu.dot_dimension_numbers<[1], [0], [0], [1], [0, 0, 1, 1], [], []>} : vector<8x32xbf16>, vector<32x8xbf16>, vector<8x8xf32> -> vector<8x8xf32>
    %c0_121 = arith.constant 0 : index
    %c0_122 = arith.constant 0 : index
    %426 = vector.load %arg9[%c0_121, %c0_122] : memref<1x8xf32, #tpu.memory_space<vmem>>, vector<1x8xf32>
    %427 = vector.broadcast %426 : vector<1x8xf32> to vector<8x8xf32>
    %428 = arith.addf %425, %427 : vector<8x8xf32>
    %c0_123 = arith.constant 0 : index
    %c0_124 = arith.constant 0 : index
    %429 = vector.load %arg10[%c0_123, %c0_124] : memref<8x8xf32, #tpu.memory_space<vmem>>, vector<8x8xf32>
    tpu.vector_store %arg10[%c0_123, %c0_124], %428 {strides = array<i32>} : memref<8x8xf32, #tpu.memory_space<vmem>>, vector<8x8xf32>,
    return
  }
  func.func @transform_0(%arg0: i32) -> (i32, i32, i32) {
    %c0_i32 = arith.constant 0 : i32
    %c0_i32_0 = arith.constant 0 : i32
    %c0_i32_1 = arith.constant 0 : i32
    return %c0_i32, %arg0, %c0_i32_0 : i32, i32, i32
  }
  func.func @transform_1(%arg0: i32) -> (i32, i32) {
    %c0_i32 = arith.constant 0 : i32
    %c0_i32_0 = arith.constant 0 : i32
    %c0_i32_1 = arith.constant 0 : i32
    return %c0_i32, %c0_i32_0 : i32, i32
  }
  func.func @transform_2(%arg0: i32) -> (i32, i32) {
    %c0_i32 = arith.constant 0 : i32
    %c0_i32_0 = arith.constant 0 : i32
    %c0_i32_1 = arith.constant 0 : i32
    return %c0_i32, %c0_i32_0 : i32, i32
  }
  func.func @transform_3(%arg0: i32) -> (i32, i32) {
    %c0_i32 = arith.constant 0 : i32
    %c0_i32_0 = arith.constant 0 : i32
    %c0_i32_1 = arith.constant 0 : i32
    return %c0_i32, %c0_i32_0 : i32, i32
  }
  func.func @transform_4(%arg0: i32) -> (i32, i32) {
    %c0_i32 = arith.constant 0 : i32
    %c0_i32_0 = arith.constant 0 : i32
    %c0_i32_1 = arith.constant 0 : i32
    return %c0_i32, %c0_i32_0 : i32, i32
  }
  func.func @transform_5(%arg0: i32) -> (i32, i32) {
    %c0_i32 = arith.constant 0 : i32
    %c0_i32_0 = arith.constant 0 : i32
    %c0_i32_1 = arith.constant 0 : i32
    return %c0_i32, %c0_i32_0 : i32, i32
  }
  func.func @transform_6(%arg0: i32) -> (i32, i32) {
    %c0_i32 = arith.constant 0 : i32
    %c0_i32_0 = arith.constant 0 : i32
    %c0_i32_1 = arith.constant 0 : i32
    return %c0_i32, %c0_i32_0 : i32, i32
  }
  func.func @transform_7(%arg0: i32) -> (i32, i32) {
    %c0_i32 = arith.constant 0 : i32
    %c0_i32_0 = arith.constant 0 : i32
    %c0_i32_1 = arith.constant 0 : i32
    return %c0_i32, %c0_i32_0 : i32, i32
  }
  func.func @transform_8(%arg0: i32) -> (i32, i32) {
    %c0_i32 = arith.constant 0 : i32
    %c0_i32_0 = arith.constant 0 : i32
    %c0_i32_1 = arith.constant 0 : i32
    return %c0_i32, %c0_i32_0 : i32, i32
  }
  func.func @transform_9(%arg0: i32) -> (i32, i32) {
    %c0_i32 = arith.constant 0 : i32
    %c0_i32_0 = arith.constant 0 : i32
    return %arg0, %c0_i32 : i32, i32
  }
}

</mosaic_0001>

<llo_original>
// kernel: lstm_model_forward.1
$region0: #{lstm_model_forward.1}
  #allocation0 [shape = 'u32[]', space=smem, size = 0x4, offset = 0x4, fixed_abs, tag = 'smem constant byte address 0x4 - core index']
  #allocation1 [shape = 'u32[72,128]{1,0:T(1,128)}', space=vmem, size = 0x9000, scoped, tag = 'internal scratch']
  #allocation2 [shape = 'f32[8,8,128]{2,1,0:T(8,128)}', space=vmem, size = 0x8000, scoped, tag = 'scratch operand']
  #allocation3 [shape = 'f32[8,8,128]{2,1,0:T(8,128)}', space=vmem, size = 0x8000, scoped, tag = 'scratch operand']
  %s0 = inlined_call_operand.vmem [shape: f32[8,8,16], index: 0, kind: input, shape index: {}]
  %s1 = inlined_call_operand.vmem [shape: f32[16,128], index: 1, kind: input, shape index: {}]
  %s2 = inlined_call_operand.vmem [shape: f32[32,128], index: 2, kind: input, shape index: {}]
  %s3 = inlined_call_operand.vmem [shape: f32[1,128], index: 3, kind: input, shape index: {}]
  %s4 = inlined_call_operand.vmem [shape: f32[32,128], index: 4, kind: input, shape index: {}]
  %s5 = inlined_call_operand.vmem [shape: f32[32,128], index: 5, kind: input, shape index: {}]
  %s6 = inlined_call_operand.vmem [shape: f32[1,128], index: 6, kind: input, shape index: {}]
  %s7 = inlined_call_operand.vmem [shape: f32[32,8], index: 7, kind: input, shape index: {}]
  %s8 = inlined_call_operand.vmem [shape: f32[1,8], index: 8, kind: input, shape index: {}]
  %s9 = inlined_call_operand.vmem [shape: f32[8,8], index: 9, kind: output, shape index: {}]
  %s10 = sld [smem:[#allocation0]]
  $region46: #{lstm_model_forward.1} parent=0
    _
  %s12 = ssub.s32 1, %s10
  %s13 = scalar_select 0, %s12, %s10
  // Predicated region
  $region2: #{lstm_model_forward.1} parent=0 // pred_check
    _
  $region3: #{lstm_model_forward.1} parent=0 // pred_check_branch
    %15 = sbr.rel (0) target = $region5
  $region4: #{lstm_model_forward.1} parent=0 // pred_region
    _
  $region5: #{lstm_model_forward.1} parent=0 // pred_fallthru
    _
  // Predicated region
  $region6: #{lstm_model_forward.1} parent=0 // pred_check
    _
  $region7: #{lstm_model_forward.1} parent=0 // pred_check_branch
    %17 = sbr.rel (0) target = $region9
  $region8: #{lstm_model_forward.1} parent=0 // pred_region
    _
  $region9: #{lstm_model_forward.1} parent=0 // pred_fallthru
    _
  // Predicated region
  $region10: #{lstm_model_forward.1} parent=0 // pred_check
    _
  $region11: #{lstm_model_forward.1} parent=0 // pred_check_branch
    %19 = sbr.rel (0) target = $region13
  $region12: #{lstm_model_forward.1} parent=0 // pred_region
    _
  $region13: #{lstm_model_forward.1} parent=0 // pred_fallthru
    _
  // Predicated region
  $region14: #{lstm_model_forward.1} parent=0 // pred_check
    _
  $region15: #{lstm_model_forward.1} parent=0 // pred_check_branch
    %21 = sbr.rel (0) target = $region17
  $region16: #{lstm_model_forward.1} parent=0 // pred_region
    _
  $region17: #{lstm_model_forward.1} parent=0 // pred_fallthru
    _
  // Predicated region
  $region18: #{lstm_model_forward.1} parent=0 // pred_check
    _
  $region19: #{lstm_model_forward.1} parent=0 // pred_check_branch
    %23 = sbr.rel (0) target = $region21
  $region20: #{lstm_model_forward.1} parent=0 // pred_region
    _
  $region21: #{lstm_model_forward.1} parent=0 // pred_fallthru
    _
  // Predicated region
  $region22: #{lstm_model_forward.1} parent=0 // pred_check
    _
  $region23: #{lstm_model_forward.1} parent=0 // pred_check_branch
    %25 = sbr.rel (0) target = $region25
  $region24: #{lstm_model_forward.1} parent=0 // pred_region
    _
  $region25: #{lstm_model_forward.1} parent=0 // pred_fallthru
    _
  // Predicated region
  $region26: #{lstm_model_forward.1} parent=0 // pred_check
    _
  $region27: #{lstm_model_forward.1} parent=0 // pred_check_branch
    %27 = sbr.rel (0) target = $region29
  $region28: #{lstm_model_forward.1} parent=0 // pred_region
    _
  $region29: #{lstm_model_forward.1} parent=0 // pred_fallthru
    _
  // Predicated region
  $region30: #{lstm_model_forward.1} parent=0 // pred_check
    _
  $region31: #{lstm_model_forward.1} parent=0 // pred_check_branch
    %29 = sbr.rel (0) target = $region33
  $region32: #{lstm_model_forward.1} parent=0 // pred_region
    _
  $region33: #{lstm_model_forward.1} parent=0 // pred_fallthru
    _
  // Predicated region
  $region34: #{lstm_model_forward.1} parent=0 // pred_check
    _
  $region35: #{lstm_model_forward.1} parent=0 // pred_check_branch
    %31 = sbr.rel (0) target = $region37
  $region36: #{lstm_model_forward.1} parent=0 // pred_region
    _
  $region37: #{lstm_model_forward.1} parent=0 // pred_fallthru
    _
  %v33 = vld [vmem:[%s0] sm:$0xff]
  %v34 = vld [vmem:[%s0 + $0x8] sm:$0xff]
  %v35 = vld [vmem:[%s0 + $0x10] sm:$0xff]
  %v36 = vld [vmem:[%s0 + $0x18] sm:$0xff]
  %v37 = vld [vmem:[%s0 + $0x20] sm:$0xff]
  %v38 = vld [vmem:[%s0 + $0x28] sm:$0xff]
  %v39 = vld [vmem:[%s0 + $0x30] sm:$0xff]
  %v40 = vld [vmem:[%s0 + $0x38] sm:$0xff]
  %v41 = vpack.c.bf16 %v34, %v33
  %v42 = vpack.c.bf16 %v36, %v35
  %v43 = vpack.c.bf16 %v38, %v37
  %v44 = vpack.c.bf16 %v40, %v39
  %v45 = vld [vmem:[%s1] sm:$0xff]
  %v46 = vld [vmem:[%s1 + $0x8] sm:$0xff]
  %v47 = vpack.c.bf16 %v46, %v45
  %v48 = vld [vmem:[%s3] sm:$0x1]
  %v50 = vperm.slane %v48, 0
  %vm52 = vcmask 130048
  %v54 = vsel %vm52, %v41, 0
  %v57 = vsel %vm52, %v42, 0
  %v60 = vsel %vm52, %v43, 0
  %v63 = vsel %vm52, %v44, 0
  %65 = vmatpush.bf16.msra.mxu0 0
  %66 = vmatpush.bf16.msra.mxu0 0
  %67 = vmatpush.bf16.msra.mxu0 0
  %68 = vmatpush.bf16.msra.mxu0 0
  %69 = vmatpush.bf16.msra.mxu0 0
  %70 = vmatpush.bf16.msra.mxu0 0
  %71 = vmatpush.bf16.msra.mxu0 0
  %72 = vmatpush.bf16.msra.mxu0 %v47
  %73 = vmatmul.bf16.gmra.mxu0 %v54
  %v74 = vpop.f32.mrf.mxu0
  %v75 = vadd.f32 %v50, %v74
  %v76 = vpop.f32.mrf.mxu0
  %v77 = vadd.f32 %v50, %v76
  %78 = vmatmul.bf16.gmra.mxu0 %v57
  %v79 = vpop.f32.mrf.mxu0
  %v80 = vadd.f32 %v50, %v79
  %v81 = vpop.f32.mrf.mxu0
  %v82 = vadd.f32 %v50, %v81
  %83 = vmatmul.bf16.gmra.mxu0 %v60
  %v84 = vpop.f32.mrf.mxu0
  %v85 = vadd.f32 %v50, %v84
  %v86 = vpop.f32.mrf.mxu0
  %v87 = vadd.f32 %v50, %v86
  %88 = vmatmul.bf16.gmra.mxu0 %v63
  %v89 = vpop.f32.mrf.mxu0
  %v90 = vadd.f32 %v50, %v89
  %v91 = vpop.f32.mrf.mxu0
  %v92 = vadd.f32 %v50, %v91
  %93 = vdwg.mxu0
  %94 = vst [vmem:[#allocation2] sm:$0xff] %v75
  %95 = vst [vmem:[#allocation2 + $0x8] sm:$0xff] %v77
  %96 = vst [vmem:[#allocation2 + $0x10] sm:$0xff] %v80
  %97 = vst [vmem:[#allocation2 + $0x18] sm:$0xff] %v82
  %98 = vst [vmem:[#allocation2 + $0x20] sm:$0xff] %v85
  %99 = vst [vmem:[#allocation2 + $0x28] sm:$0xff] %v87
  %100 = vst [vmem:[#allocation2 + $0x30] sm:$0xff] %v90
  %101 = vst [vmem:[#allocation2 + $0x38] sm:$0xff] %v92
  %v102 = vld [vmem:[%s2] sm:$0xff]
  %v103 = vld [vmem:[%s2 + $0x8] sm:$0xff]
  %v104 = vld [vmem:[%s2 + $0x10] sm:$0xff]
  %v105 = vld [vmem:[%s2 + $0x18] sm:$0xff]
  %v106 = vpack.c.bf16 %v103, %v102
  %v107 = vpack.c.bf16 %v105, %v104
  %v108 = vld [vmem:[%s4] sm:$0xff]
  %v109 = vld [vmem:[%s4 + $0x8] sm:$0xff]
  %v110 = vld [vmem:[%s4 + $0x10] sm:$0xff]
  %v111 = vld [vmem:[%s4 + $0x18] sm:$0xff]
  %v112 = vpack.c.bf16 %v109, %v108
  %v113 = vpack.c.bf16 %v111, %v110
  %v114 = vld [vmem:[%s6] sm:$0x1]
  %v115 = vld [vmem:[#allocation2] sm:$0xff]
  %vm116 = vcmask 261120
  %v118 = vsel %vm116, 0, 0
  %120 = vmatpush.bf16.msra.mxu0 0
  %121 = vmatpush.bf16.msra.mxu0 0
  %122 = vmatpush.bf16.msra.mxu0 0
  %123 = vmatpush.bf16.msra.mxu0 0
  %124 = vmatpush.bf16.msra.mxu0 0
  %125 = vmatpush.bf16.msra.mxu0 0
  %126 = vmatpush.bf16.msra.mxu0 %v107
  %127 = vmatpush.bf16.msra.mxu0 %v106
  %128 = vmatmul.bf16.gmra.mxu0 %v118
  %v129 = vpop.f32.mrf.mxu0
  %v130 = vadd.f32 0.0, %v129
  %v131 = vpop.f32.mrf.mxu0
  %132 = vdwg.mxu0
  %v133 = vadd.f32 %v115, %v130
  %v134 = vxor.u32 %v133, 2147483648
  %v135 = vmul.f32 %v134, 1.442695
  %v136 = vpow.pop %v135
  %v137 = vadd.f32 %v136, 1.0
  %v138 = vrcp.pop %v137
  %v139 = vmul.f32 %v137, %v138
  %v140 = vsub.f32 1.0, %v139
  %v141 = vmul.f32 %v138, %v140
  %v142 = vadd.f32 %v138, %v141
  %vm143 = vweird.f32 %v137
  %vm144 = vweird.f32 %v138
  %vm145 = vmor %vm143, %vm144
  %v146 = vsel %vm145, %v138, %v142
  %v147 = vand.u32 2147483647, %v137
  %vm148 = vcmp.eq.f32.partialorder %v147, 8.507059e+37
  %v149 = vand.u32 %v137, 2147483648
  %v150 = vor.u32 1.1754944e-38, %v149
  %v151 = vsel %vm148, %v150, %v146
  %v152 = vmul.f32 1.0, %v151
  %v153 = vtanh.pop %v133
  %v154 = vmul.f32 %v152, 0.0
  %156 = vrot.lane.b32.xlu0 %v153, 64
  %v157 = vpop.permute.xlu0 %156
  %v159 = vmul.f32 %v152, %v157
  %161 = vrot.lane.b32.xlu0 %v159, 32
  %v162 = vpop.permute.xlu0 %161
  %v164 = vadd.f32 %v154, %v162
  %v165 = vtanh.pop %v164
  %167 = vrot.lane.b32.xlu0 %v165, 64
  %v168 = vpop.permute.xlu0 %167
  %v170 = vmul.f32 %v152, %v168
  %v171 = vpack.c.bf16 %v170, %v170
  %v173 = vperm.slane %v114, 0
  %176 = vrot.lane.b32.xlu0 %v171, 32
  %v177 = vpop.permute.xlu0 %176
  %v179 = vsel %vm116, %v177, 0
  %181 = vmatpush.bf16.msra.mxu0 0
  %182 = vmatpush.bf16.msra.mxu0 0
  %183 = vmatpush.bf16.msra.mxu0 0
  %184 = vmatpush.bf16.msra.mxu0 0
  %185 = vmatpush.bf16.msra.mxu0 0
  %186 = vmatpush.bf16.msra.mxu0 0
  %187 = vmatpush.bf16.msra.mxu0 %v113
  %188 = vmatpush.bf16.msra.mxu0 %v112
  %189 = vmatmul.bf16.gmra.mxu0 %v179
  %v190 = vpop.f32.mrf.mxu0
  %v191 = vadd.f32 %v173, %v190
  %v192 = vpop.f32.mrf.mxu0
  %193 = vdwg.mxu0
  %194 = vst [vmem:[#allocation3] sm:$0xff] %v191
  %s195 = scalar_lea.vmem [#allocation2], 8
  %v196 = vld [vmem:[%s195] sm:$0xff]
  %197 = vmatpush.bf16.msra.mxu0 0
  %198 = vmatpush.bf16.msra.mxu0 0
  %199 = vmatpush.bf16.msra.mxu0 0
  %200 = vmatpush.bf16.msra.mxu0 0
  %201 = vmatpush.bf16.msra.mxu0 0
  %202 = vmatpush.bf16.msra.mxu0 0
  %203 = vmatpush.bf16.msra.mxu0 %v107
  %204 = vmatpush.bf16.msra.mxu0 %v106
  %205 = vmatmul.bf16.gmra.mxu0 %v179
  %v206 = vpop.f32.mrf.mxu0
  %v207 = vadd.f32 0.0, %v206
  %v208 = vpop.f32.mrf.mxu0
  %209 = vdwg.mxu0
  %v210 = vadd.f32 %v196, %v207
  %v211 = vxor.u32 %v210, 2147483648
  %v212 = vmul.f32 %v211, 1.442695
  %v213 = vpow.pop %v212
  %v214 = vadd.f32 %v213, 1.0
  %v215 = vrcp.pop %v214
  %v216 = vmul.f32 %v214, %v215
  %v217 = vsub.f32 1.0, %v216
  %v218 = vmul.f32 %v215, %v217
  %v219 = vadd.f32 %v215, %v218
  %vm220 = vweird.f32 %v214
  %vm221 = vweird.f32 %v215
  %vm222 = vmor %vm220, %vm221
  %v223 = vsel %vm222, %v215, %v219
  %v224 = vand.u32 2147483647, %v214
  %vm225 = vcmp.eq.f32.partialorder %v224, 8.507059e+37
  %v226 = vand.u32 %v214, 2147483648
  %v227 = vor.u32 1.1754944e-38, %v226
  %v228 = vsel %vm225, %v227, %v223
  %v229 = vmul.f32 1.0, %v228
  %v230 = vtanh.pop %v210
  %v231 = vmul.f32 %v229, %v164
  %233 = vrot.lane.b32.xlu0 %v230, 64
  %v234 = vpop.permute.xlu0 %233
  %v236 = vmul.f32 %v229, %v234
  %238 = vrot.lane.b32.xlu0 %v236, 32
  %v239 = vpop.permute.xlu0 %238
  %v241 = vadd.f32 %v231, %v239
  %v242 = vtanh.pop %v241
  %244 = vrot.lane.b32.xlu0 %v242, 64
  %v245 = vpop.permute.xlu0 %244
  %v247 = vmul.f32 %v229, %v245
  %v248 = vpack.c.bf16 %v247, %v247
  %250 = vrot.lane.b32.xlu0 %v248, 32
  %v251 = vpop.permute.xlu0 %250
  %v253 = vsel %vm116, %v251, 0
  %255 = vmatpush.bf16.msra.mxu0 0
  %256 = vmatpush.bf16.msra.mxu0 0
  %257 = vmatpush.bf16.msra.mxu0 0
  %258 = vmatpush.bf16.msra.mxu0 0
  %259 = vmatpush.bf16.msra.mxu0 0
  %260 = vmatpush.bf16.msra.mxu0 0
  %261 = vmatpush.bf16.msra.mxu0 %v113
  %262 = vmatpush.bf16.msra.mxu0 %v112
  %263 = vmatmul.bf16.gmra.mxu0 %v253
  %v264 = vpop.f32.mrf.mxu0
  %v265 = vadd.f32 %v173, %v264
  %v266 = vpop.f32.mrf.mxu0
  %267 = vdwg.mxu0
  %s268 = scalar_lea.vmem [#allocation3], 8
  %269 = vst [vmem:[%s268] sm:$0xff] %v265
  %s270 = scalar_lea.vmem [#allocation2], 16
  %v271 = vld [vmem:[%s270] sm:$0xff]
  %272 = vmatpush.bf16.msra.mxu0 0
  %273 = vmatpush.bf16.msra.mxu0 0
  %274 = vmatpush.bf16.msra.mxu0 0
  %275 = vmatpush.bf16.msra.mxu0 0
  %276 = vmatpush.bf16.msra.mxu0 0
  %277 = vmatpush.bf16.msra.mxu0 0
  %278 = vmatpush.bf16.msra.mxu0 %v107
  %279 = vmatpush.bf16.msra.mxu0 %v106
  %280 = vmatmul.bf16.gmra.mxu0 %v253
  %v281 = vpop.f32.mrf.mxu0
  %v282 = vadd.f32 0.0, %v281
  %v283 = vpop.f32.mrf.mxu0
  %284 = vdwg.mxu0
  %v285 = vadd.f32 %v271, %v282
  %v286 = vxor.u32 %v285, 2147483648
  %v287 = vmul.f32 %v286, 1.442695
  %v288 = vpow.pop %v287
  %v289 = vadd.f32 %v288, 1.0
  %v290 = vrcp.pop %v289
  %v291 = vmul.f32 %v289, %v290
  %v292 = vsub.f32 1.0, %v291
  %v293 = vmul.f32 %v290, %v292
  %v294 = vadd.f32 %v290, %v293
  %vm295 = vweird.f32 %v289
  %vm296 = vweird.f32 %v290
  %vm297 = vmor %vm295, %vm296
  %v298 = vsel %vm297, %v290, %v294
  %v299 = vand.u32 2147483647, %v289
  %vm300 = vcmp.eq.f32.partialorder %v299, 8.507059e+37
  %v301 = vand.u32 %v289, 2147483648
  %v302 = vor.u32 1.1754944e-38, %v301
  %v303 = vsel %vm300, %v302, %v298
  %v304 = vmul.f32 1.0, %v303
  %v305 = vtanh.pop %v285
  %v306 = vmul.f32 %v304, %v241
  %308 = vrot.lane.b32.xlu0 %v305, 64
  %v309 = vpop.permute.xlu0 %308
  %v311 = vmul.f32 %v304, %v309
  %313 = vrot.lane.b32.xlu0 %v311, 32
  %v314 = vpop.permute.xlu0 %313
  %v316 = vadd.f32 %v306, %v314
  %v317 = vtanh.pop %v316
  %319 = vrot.lane.b32.xlu0 %v317, 64
  %v320 = vpop.permute.xlu0 %319
  %v322 = vmul.f32 %v304, %v320
  %v323 = vpack.c.bf16 %v322, %v322
  %325 = vrot.lane.b32.xlu0 %v323, 32
  %v326 = vpop.permute.xlu0 %325
  %v328 = vsel %vm116, %v326, 0
  %330 = vmatpush.bf16.msra.mxu0 0
  %331 = vmatpush.bf16.msra.mxu0 0
  %332 = vmatpush.bf16.msra.mxu0 0
  %333 = vmatpush.bf16.msra.mxu0 0
  %334 = vmatpush.bf16.msra.mxu0 0
  %335 = vmatpush.bf16.msra.mxu0 0
  %336 = vmatpush.bf16.msra.mxu0 %v113
  %337 = vmatpush.bf16.msra.mxu0 %v112
  %338 = vmatmul.bf16.gmra.mxu0 %v328
  %v339 = vpop.f32.mrf.mxu0
  %v340 = vadd.f32 %v173, %v339
  %v341 = vpop.f32.mrf.mxu0
  %342 = vdwg.mxu0
  %s343 = scalar_lea.vmem [#allocation3], 16
  %344 = vst [vmem:[%s343] sm:$0xff] %v340
  %s345 = scalar_lea.vmem [#allocation2], 24
  %v346 = vld [vmem:[%s345] sm:$0xff]
  %347 = vmatpush.bf16.msra.mxu0 0
  %348 = vmatpush.bf16.msra.mxu0 0
  %349 = vmatpush.bf16.msra.mxu0 0
  %350 = vmatpush.bf16.msra.mxu0 0
  %351 = vmatpush.bf16.msra.mxu0 0
  %352 = vmatpush.bf16.msra.mxu0 0
  %353 = vmatpush.bf16.msra.mxu0 %v107
  %354 = vmatpush.bf16.msra.mxu0 %v106
  %355 = vmatmul.bf16.gmra.mxu0 %v328
  %v356 = vpop.f32.mrf.mxu0
  %v357 = vadd.f32 0.0, %v356
  %v358 = vpop.f32.mrf.mxu0
  %359 = vdwg.mxu0
  %v360 = vadd.f32 %v346, %v357
  %v361 = vxor.u32 %v360, 2147483648
  %v362 = vmul.f32 %v361, 1.442695
  %v363 = vpow.pop %v362
  %v364 = vadd.f32 %v363, 1.0
  %v365 = vrcp.pop %v364
  %v366 = vmul.f32 %v364, %v365
  %v367 = vsub.f32 1.0, %v366
  %v368 = vmul.f32 %v365, %v367
  %v369 = vadd.f32 %v365, %v368
  %vm370 = vweird.f32 %v364
  %vm371 = vweird.f32 %v365
  %vm372 = vmor %vm370, %vm371
  %v373 = vsel %vm372, %v365, %v369
  %v374 = vand.u32 2147483647, %v364
  %vm375 = vcmp.eq.f32.partialorder %v374, 8.507059e+37
  %v376 = vand.u32 %v364, 2147483648
  %v377 = vor.u32 1.1754944e-38, %v376
  %v378 = vsel %vm375, %v377, %v373
  %v379 = vmul.f32 1.0, %v378
  %v380 = vtanh.pop %v360
  %v381 = vmul.f32 %v379, %v316
  %383 = vrot.lane.b32.xlu0 %v380, 64
  %v384 = vpop.permute.xlu0 %383
  %v386 = vmul.f32 %v379, %v384
  %388 = vrot.lane.b32.xlu0 %v386, 32
  %v389 = vpop.permute.xlu0 %388
  %v391 = vadd.f32 %v381, %v389
  %v392 = vtanh.pop %v391
  %394 = vrot.lane.b32.xlu0 %v392, 64
  %v395 = vpop.permute.xlu0 %394
  %v397 = vmul.f32 %v379, %v395
  %v398 = vpack.c.bf16 %v397, %v397
  %400 = vrot.lane.b32.xlu0 %v398, 32
  %v401 = vpop.permute.xlu0 %400
  %v403 = vsel %vm116, %v401, 0
  %405 = vmatpush.bf16.msra.mxu0 0
  %406 = vmatpush.bf16.msra.mxu0 0
  %407 = vmatpush.bf16.msra.mxu0 0
  %408 = vmatpush.bf16.msra.mxu0 0
  %409 = vmatpush.bf16.msra.mxu0 0
  %410 = vmatpush.bf16.msra.mxu0 0
  %411 = vmatpush.bf16.msra.mxu0 %v113
  %412 = vmatpush.bf16.msra.mxu0 %v112
  %413 = vmatmul.bf16.gmra.mxu0 %v403
  %v414 = vpop.f32.mrf.mxu0
  %v415 = vadd.f32 %v173, %v414
  %v416 = vpop.f32.mrf.mxu0
  %417 = vdwg.mxu0
  %s418 = scalar_lea.vmem [#allocation3], 24
  %419 = vst [vmem:[%s418] sm:$0xff] %v415
  %s420 = scalar_lea.vmem [#allocation2], 32
  %v421 = vld [vmem:[%s420] sm:$0xff]
  %422 = vmatpush.bf16.msra.mxu0 0
  %423 = vmatpush.bf16.msra.mxu0 0
  %424 = vmatpush.bf16.msra.mxu0 0
  %425 = vmatpush.bf16.msra.mxu0 0
  %426 = vmatpush.bf16.msra.mxu0 0
  %427 = vmatpush.bf16.msra.mxu0 0
  %428 = vmatpush.bf16.msra.mxu0 %v107
  %429 = vmatpush.bf16.msra.mxu0 %v106
  %430 = vmatmul.bf16.gmra.mxu0 %v403
  %v431 = vpop.f32.mrf.mxu0
  %v432 = vadd.f32 0.0, %v431
  %v433 = vpop.f32.mrf.mxu0
  %434 = vdwg.mxu0
  %v435 = vadd.f32 %v421, %v432
  %v436 = vxor.u32 %v435, 2147483648
  %v437 = vmul.f32 %v436, 1.442695
  %v438 = vpow.pop %v437
  %v439 = vadd.f32 %v438, 1.0
  %v440 = vrcp.pop %v439
  %v441 = vmul.f32 %v439, %v440
  %v442 = vsub.f32 1.0, %v441
  %v443 = vmul.f32 %v440, %v442
  %v444 = vadd.f32 %v440, %v443
  %vm445 = vweird.f32 %v439
  %vm446 = vweird.f32 %v440
  %vm447 = vmor %vm445, %vm446
  %v448 = vsel %vm447, %v440, %v444
  %v449 = vand.u32 2147483647, %v439
  %vm450 = vcmp.eq.f32.partialorder %v449, 8.507059e+37
  %v451 = vand.u32 %v439, 2147483648
  %v452 = vor.u32 1.1754944e-38, %v451
  %v453 = vsel %vm450, %v452, %v448
  %v454 = vmul.f32 1.0, %v453
  %v455 = vtanh.pop %v435
  %v456 = vmul.f32 %v454, %v391
  %458 = vrot.lane.b32.xlu0 %v455, 64
  %v459 = vpop.permute.xlu0 %458
  %v461 = vmul.f32 %v454, %v459
  %463 = vrot.lane.b32.xlu0 %v461, 32
  %v464 = vpop.permute.xlu0 %463
  %v466 = vadd.f32 %v456, %v464
  %v467 = vtanh.pop %v466
  %469 = vrot.lane.b32.xlu0 %v467, 64
  %v470 = vpop.permute.xlu0 %469
  %v472 = vmul.f32 %v454, %v470
  %v473 = vpack.c.bf16 %v472, %v472
  %475 = vrot.lane.b32.xlu0 %v473, 32
  %v476 = vpop.permute.xlu0 %475
  %v478 = vsel %vm116, %v476, 0
  %480 = vmatpush.bf16.msra.mxu0 0
  %481 = vmatpush.bf16.msra.mxu0 0
  %482 = vmatpush.bf16.msra.mxu0 0
  %483 = vmatpush.bf16.msra.mxu0 0
  %484 = vmatpush.bf16.msra.mxu0 0
  %485 = vmatpush.bf16.msra.mxu0 0
  %486 = vmatpush.bf16.msra.mxu0 %v113
  %487 = vmatpush.bf16.msra.mxu0 %v112
  %488 = vmatmul.bf16.gmra.mxu0 %v478
  %v489 = vpop.f32.mrf.mxu0
  %v490 = vadd.f32 %v173, %v489
  %v491 = vpop.f32.mrf.mxu0
  %492 = vdwg.mxu0
  %s493 = scalar_lea.vmem [#allocation3], 32
  %494 = vst [vmem:[%s493] sm:$0xff] %v490
  %s495 = scalar_lea.vmem [#allocation2], 40
  %v496 = vld [vmem:[%s495] sm:$0xff]
  %497 = vmatpush.bf16.msra.mxu0 0
  %498 = vmatpush.bf16.msra.mxu0 0
  %499 = vmatpush.bf16.msra.mxu0 0
  %500 = vmatpush.bf16.msra.mxu0 0
  %501 = vmatpush.bf16.msra.mxu0 0
  %502 = vmatpush.bf16.msra.mxu0 0
  %503 = vmatpush.bf16.msra.mxu0 %v107
  %504 = vmatpush.bf16.msra.mxu0 %v106
  %505 = vmatmul.bf16.gmra.mxu0 %v478
  %v506 = vpop.f32.mrf.mxu0
  %v507 = vadd.f32 0.0, %v506
  %v508 = vpop.f32.mrf.mxu0
  %509 = vdwg.mxu0
  %v510 = vadd.f32 %v496, %v507
  %v511 = vxor.u32 %v510, 2147483648
  %v512 = vmul.f32 %v511, 1.442695
  %v513 = vpow.pop %v512
  %v514 = vadd.f32 %v513, 1.0
  %v515 = vrcp.pop %v514
  %v516 = vmul.f32 %v514, %v515
  %v517 = vsub.f32 1.0, %v516
  %v518 = vmul.f32 %v515, %v517
  %v519 = vadd.f32 %v515, %v518
  %vm520 = vweird.f32 %v514
  %vm521 = vweird.f32 %v515
  %vm522 = vmor %vm520, %vm521
  %v523 = vsel %vm522, %v515, %v519
  %v524 = vand.u32 2147483647, %v514
  %vm525 = vcmp.eq.f32.partialorder %v524, 8.507059e+37
  %v526 = vand.u32 %v514, 2147483648
  %v527 = vor.u32 1.1754944e-38, %v526
  %v528 = vsel %vm525, %v527, %v523
  %v529 = vmul.f32 1.0, %v528
  %v530 = vtanh.pop %v510
  %v531 = vmul.f32 %v529, %v466
  %533 = vrot.lane.b32.xlu0 %v530, 64
  %v534 = vpop.permute.xlu0 %533
  %v536 = vmul.f32 %v529, %v534
  %538 = vrot.lane.b32.xlu0 %v536, 32
  %v539 = vpop.permute.xlu0 %538
  %v541 = vadd.f32 %v531, %v539
  %v542 = vtanh.pop %v541
  %544 = vrot.lane.b32.xlu0 %v542, 64
  %v545 = vpop.permute.xlu0 %544
  %v547 = vmul.f32 %v529, %v545
  %v548 = vpack.c.bf16 %v547, %v547
  %550 = vrot.lane.b32.xlu0 %v548, 32
  %v551 = vpop.permute.xlu0 %550
  %v553 = vsel %vm116, %v551, 0
  %555 = vmatpush.bf16.msra.mxu0 0
  %556 = vmatpush.bf16.msra.mxu0 0
  %557 = vmatpush.bf16.msra.mxu0 0
  %558 = vmatpush.bf16.msra.mxu0 0
  %559 = vmatpush.bf16.msra.mxu0 0
  %560 = vmatpush.bf16.msra.mxu0 0
  %561 = vmatpush.bf16.msra.mxu0 %v113
  %562 = vmatpush.bf16.msra.mxu0 %v112
  %563 = vmatmul.bf16.gmra.mxu0 %v553
  %v564 = vpop.f32.mrf.mxu0
  %v565 = vadd.f32 %v173, %v564
  %v566 = vpop.f32.mrf.mxu0
  %567 = vdwg.mxu0
  %s568 = scalar_lea.vmem [#allocation3], 40
  %569 = vst [vmem:[%s568] sm:$0xff] %v565
  %s570 = scalar_lea.vmem [#allocation2], 48
  %v571 = vld [vmem:[%s570] sm:$0xff]
  %572 = vmatpush.bf16.msra.mxu0 0
  %573 = vmatpush.bf16.msra.mxu0 0
  %574 = vmatpush.bf16.msra.mxu0 0
  %575 = vmatpush.bf16.msra.mxu0 0
  %576 = vmatpush.bf16.msra.mxu0 0
  %577 = vmatpush.bf16.msra.mxu0 0
  %578 = vmatpush.bf16.msra.mxu0 %v107
  %579 = vmatpush.bf16.msra.mxu0 %v106
  %580 = vmatmul.bf16.gmra.mxu0 %v553
  %v581 = vpop.f32.mrf.mxu0
  %v582 = vadd.f32 0.0, %v581
  %v583 = vpop.f32.mrf.mxu0
  %584 = vdwg.mxu0
  %v585 = vadd.f32 %v571, %v582
  %v586 = vxor.u32 %v585, 2147483648
  %v587 = vmul.f32 %v586, 1.442695
  %v588 = vpow.pop %v587
  %v589 = vadd.f32 %v588, 1.0
  %v590 = vrcp.pop %v589
  %v591 = vmul.f32 %v589, %v590
  %v592 = vsub.f32 1.0, %v591
  %v593 = vmul.f32 %v590, %v592
  %v594 = vadd.f32 %v590, %v593
  %vm595 = vweird.f32 %v589
  %vm596 = vweird.f32 %v590
  %vm597 = vmor %vm595, %vm596
  %v598 = vsel %vm597, %v590, %v594
  %v599 = vand.u32 2147483647, %v589
  %vm600 = vcmp.eq.f32.partialorder %v599, 8.507059e+37
  %v601 = vand.u32 %v589, 2147483648
  %v602 = vor.u32 1.1754944e-38, %v601
  %v603 = vsel %vm600, %v602, %v598
  %v604 = vmul.f32 1.0, %v603
  %v605 = vtanh.pop %v585
  %v606 = vmul.f32 %v604, %v541
  %608 = vrot.lane.b32.xlu0 %v605, 64
  %v609 = vpop.permute.xlu0 %608
  %v611 = vmul.f32 %v604, %v609
  %613 = vrot.lane.b32.xlu0 %v611, 32
  %v614 = vpop.permute.xlu0 %613
  %v616 = vadd.f32 %v606, %v614
  %v617 = vtanh.pop %v616
  %619 = vrot.lane.b32.xlu0 %v617, 64
  %v620 = vpop.permute.xlu0 %619
  %v622 = vmul.f32 %v604, %v620
  %v623 = vpack.c.bf16 %v622, %v622
  %625 = vrot.lane.b32.xlu0 %v623, 32
  %v626 = vpop.permute.xlu0 %625
  %v628 = vsel %vm116, %v626, 0
  %630 = vmatpush.bf16.msra.mxu0 0
  %631 = vmatpush.bf16.msra.mxu0 0
  %632 = vmatpush.bf16.msra.mxu0 0
  %633 = vmatpush.bf16.msra.mxu0 0
  %634 = vmatpush.bf16.msra.mxu0 0
  %635 = vmatpush.bf16.msra.mxu0 0
  %636 = vmatpush.bf16.msra.mxu0 %v113
  %637 = vmatpush.bf16.msra.mxu0 %v112
  %638 = vmatmul.bf16.gmra.mxu0 %v628
  %v639 = vpop.f32.mrf.mxu0
  %v640 = vadd.f32 %v173, %v639
  %v641 = vpop.f32.mrf.mxu0
  %642 = vdwg.mxu0
  %s643 = scalar_lea.vmem [#allocation3], 48
  %644 = vst [vmem:[%s643] sm:$0xff] %v640
  %s645 = scalar_lea.vmem [#allocation2], 56
  %v646 = vld [vmem:[%s645] sm:$0xff]
  %647 = vmatpush.bf16.msra.mxu0 0
  %648 = vmatpush.bf16.msra.mxu0 0
  %649 = vmatpush.bf16.msra.mxu0 0
  %650 = vmatpush.bf16.msra.mxu0 0
  %651 = vmatpush.bf16.msra.mxu0 0
  %652 = vmatpush.bf16.msra.mxu0 0
  %653 = vmatpush.bf16.msra.mxu0 %v107
  %654 = vmatpush.bf16.msra.mxu0 %v106
  %655 = vmatmul.bf16.gmra.mxu0 %v628
  %v656 = vpop.f32.mrf.mxu0
  %v657 = vadd.f32 0.0, %v656
  %v658 = vpop.f32.mrf.mxu0
  %659 = vdwg.mxu0
  %v660 = vadd.f32 %v646, %v657
  %v661 = vxor.u32 %v660, 2147483648
  %v662 = vmul.f32 %v661, 1.442695
  %v663 = vpow.pop %v662
  %v664 = vadd.f32 %v663, 1.0
  %v665 = vrcp.pop %v664
  %v666 = vmul.f32 %v664, %v665
  %v667 = vsub.f32 1.0, %v666
  %v668 = vmul.f32 %v665, %v667
  %v669 = vadd.f32 %v665, %v668
  %vm670 = vweird.f32 %v664
  %vm671 = vweird.f32 %v665
  %vm672 = vmor %vm670, %vm671
  %v673 = vsel %vm672, %v665, %v669
  %v674 = vand.u32 2147483647, %v664
  %vm675 = vcmp.eq.f32.partialorder %v674, 8.507059e+37
  %v676 = vand.u32 %v664, 2147483648
  %v677 = vor.u32 1.1754944e-38, %v676
  %v678 = vsel %vm675, %v677, %v673
  %v679 = vmul.f32 1.0, %v678
  %v680 = vtanh.pop %v660
  %v681 = vmul.f32 %v679, %v616
  %683 = vrot.lane.b32.xlu0 %v680, 64
  %v684 = vpop.permute.xlu0 %683
  %v686 = vmul.f32 %v679, %v684
  %688 = vrot.lane.b32.xlu0 %v686, 32
  %v689 = vpop.permute.xlu0 %688
  %v691 = vadd.f32 %v681, %v689
  %v692 = vtanh.pop %v691
  %694 = vrot.lane.b32.xlu0 %v692, 64
  %v695 = vpop.permute.xlu0 %694
  %v697 = vmul.f32 %v679, %v695
  %v698 = vpack.c.bf16 %v697, %v697
  %700 = vrot.lane.b32.xlu0 %v698, 32
  %v701 = vpop.permute.xlu0 %700
  %v703 = vsel %vm116, %v701, 0
  %705 = vmatpush.bf16.msra.mxu0 0
  %706 = vmatpush.bf16.msra.mxu0 0
  %707 = vmatpush.bf16.msra.mxu0 0
  %708 = vmatpush.bf16.msra.mxu0 0
  %709 = vmatpush.bf16.msra.mxu0 0
  %710 = vmatpush.bf16.msra.mxu0 0
  %711 = vmatpush.bf16.msra.mxu0 %v113
  %712 = vmatpush.bf16.msra.mxu0 %v112
  %713 = vmatmul.bf16.gmra.mxu0 %v703
  %v714 = vpop.f32.mrf.mxu0
  %v715 = vadd.f32 %v173, %v714
  %v716 = vpop.f32.mrf.mxu0
  %717 = vdwg.mxu0
  %s718 = scalar_lea.vmem [#allocation3], 56
  %719 = vst [vmem:[%s718] sm:$0xff] %v715
  %v720 = vld [vmem:[%s5] sm:$0xff]
  %v721 = vld [vmem:[%s5 + $0x8] sm:$0xff]
  %v722 = vld [vmem:[%s5 + $0x10] sm:$0xff]
  %v723 = vld [vmem:[%s5 + $0x18] sm:$0xff]
  %v724 = vpack.c.bf16 %v721, %v720
  %v725 = vpack.c.bf16 %v723, %v722
  %v726 = vld [vmem:[#allocation3] sm:$0xff]
  %727 = vmatpush.bf16.msra.mxu0 0
  %728 = vmatpush.bf16.msra.mxu0 0
  %729 = vmatpush.bf16.msra.mxu0 0
  %730 = vmatpush.bf16.msra.mxu0 0
  %731 = vmatpush.bf16.msra.mxu0 0
  %732 = vmatpush.bf16.msra.mxu0 0
  %733 = vmatpush.bf16.msra.mxu0 %v725
  %734 = vmatpush.bf16.msra.mxu0 %v724
  %735 = vmatmul.bf16.gmra.mxu0 %v118
  %v736 = vpop.f32.mrf.mxu0
  %v737 = vadd.f32 0.0, %v736
  %v738 = vpop.f32.mrf.mxu0
  %739 = vdwg.mxu0
  %v740 = vadd.f32 %v726, %v737
  %v741 = vxor.u32 %v740, 2147483648
  %v742 = vmul.f32 %v741, 1.442695
  %v743 = vpow.pop %v742
  %v744 = vadd.f32 %v743, 1.0
  %v745 = vrcp.pop %v744
  %v746 = vmul.f32 %v744, %v745
  %v747 = vsub.f32 1.0, %v746
  %v748 = vmul.f32 %v745, %v747
  %v749 = vadd.f32 %v745, %v748
  %vm750 = vweird.f32 %v744
  %vm751 = vweird.f32 %v745
  %vm752 = vmor %vm750, %vm751
  %v753 = vsel %vm752, %v745, %v749
  %v754 = vand.u32 2147483647, %v744
  %vm755 = vcmp.eq.f32.partialorder %v754, 8.507059e+37
  %v756 = vand.u32 %v744, 2147483648
  %v757 = vor.u32 1.1754944e-38, %v756
  %v758 = vsel %vm755, %v757, %v753
  %v759 = vmul.f32 1.0, %v758
  %v760 = vtanh.pop %v740
  %v761 = vmul.f32 %v759, 0.0
  %763 = vrot.lane.b32.xlu0 %v760, 64
  %v764 = vpop.permute.xlu0 %763
  %v766 = vmul.f32 %v759, %v764
  %768 = vrot.lane.b32.xlu0 %v766, 32
  %v769 = vpop.permute.xlu0 %768
  %v771 = vadd.f32 %v761, %v769
  %v772 = vtanh.pop %v771
  %774 = vrot.lane.b32.xlu0 %v772, 64
  %v775 = vpop.permute.xlu0 %774
  %v777 = vmul.f32 %v759, %v775
  %v778 = vld [vmem:[%s268] sm:$0xff]
  %v779 = vpack.c.bf16 %v777, %v777
  %781 = vrot.lane.b32.xlu0 %v779, 32
  %v782 = vpop.permute.xlu0 %781
  %v784 = vsel %vm116, %v782, 0
  %786 = vmatpush.bf16.msra.mxu0 0
  %787 = vmatpush.bf16.msra.mxu0 0
  %788 = vmatpush.bf16.msra.mxu0 0
  %789 = vmatpush.bf16.msra.mxu0 0
  %790 = vmatpush.bf16.msra.mxu0 0
  %791 = vmatpush.bf16.msra.mxu0 0
  %792 = vmatpush.bf16.msra.mxu0 %v725
  %793 = vmatpush.bf16.msra.mxu0 %v724
  %794 = vmatmul.bf16.gmra.mxu0 %v784
  %v795 = vpop.f32.mrf.mxu0
  %v796 = vadd.f32 0.0, %v795
  %v797 = vpop.f32.mrf.mxu0
  %798 = vdwg.mxu0
  %v799 = vadd.f32 %v778, %v796
  %v800 = vxor.u32 %v799, 2147483648
  %v801 = vmul.f32 %v800, 1.442695
  %v802 = vpow.pop %v801
  %v803 = vadd.f32 %v802, 1.0
  %v804 = vrcp.pop %v803
  %v805 = vmul.f32 %v803, %v804
  %v806 = vsub.f32 1.0, %v805
  %v807 = vmul.f32 %v804, %v806
  %v808 = vadd.f32 %v804, %v807
  %vm809 = vweird.f32 %v803
  %vm810 = vweird.f32 %v804
  %vm811 = vmor %vm809, %vm810
  %v812 = vsel %vm811, %v804, %v808
  %v813 = vand.u32 2147483647, %v803
  %vm814 = vcmp.eq.f32.partialorder %v813, 8.507059e+37
  %v815 = vand.u32 %v803, 2147483648
  %v816 = vor.u32 1.1754944e-38, %v815
  %v817 = vsel %vm814, %v816, %v812
  %v818 = vmul.f32 1.0, %v817
  %v819 = vtanh.pop %v799
  %v820 = vmul.f32 %v818, %v771
  %822 = vrot.lane.b32.xlu0 %v819, 64
  %v823 = vpop.permute.xlu0 %822
  %v825 = vmul.f32 %v818, %v823
  %827 = vrot.lane.b32.xlu0 %v825, 32
  %v828 = vpop.permute.xlu0 %827
  %v830 = vadd.f32 %v820, %v828
  %v831 = vtanh.pop %v830
  %833 = vrot.lane.b32.xlu0 %v831, 64
  %v834 = vpop.permute.xlu0 %833
  %v836 = vmul.f32 %v818, %v834
  %v837 = vld [vmem:[%s343] sm:$0xff]
  %v838 = vpack.c.bf16 %v836, %v836
  %840 = vrot.lane.b32.xlu0 %v838, 32
  %v841 = vpop.permute.xlu0 %840
  %v843 = vsel %vm116, %v841, 0
  %845 = vmatpush.bf16.msra.mxu0 0
  %846 = vmatpush.bf16.msra.mxu0 0
  %847 = vmatpush.bf16.msra.mxu0 0
  %848 = vmatpush.bf16.msra.mxu0 0
  %849 = vmatpush.bf16.msra.mxu0 0
  %850 = vmatpush.bf16.msra.mxu0 0
  %851 = vmatpush.bf16.msra.mxu0 %v725
  %852 = vmatpush.bf16.msra.mxu0 %v724
  %853 = vmatmul.bf16.gmra.mxu0 %v843
  %v854 = vpop.f32.mrf.mxu0
  %v855 = vadd.f32 0.0, %v854
  %v856 = vpop.f32.mrf.mxu0
  %857 = vdwg.mxu0
  %v858 = vadd.f32 %v837, %v855
  %v859 = vxor.u32 %v858, 2147483648
  %v860 = vmul.f32 %v859, 1.442695
  %v861 = vpow.pop %v860
  %v862 = vadd.f32 %v861, 1.0
  %v863 = vrcp.pop %v862
  %v864 = vmul.f32 %v862, %v863
  %v865 = vsub.f32 1.0, %v864
  %v866 = vmul.f32 %v863, %v865
  %v867 = vadd.f32 %v863, %v866
  %vm868 = vweird.f32 %v862
  %vm869 = vweird.f32 %v863
  %vm870 = vmor %vm868, %vm869
  %v871 = vsel %vm870, %v863, %v867
  %v872 = vand.u32 2147483647, %v862
  %vm873 = vcmp.eq.f32.partialorder %v872, 8.507059e+37
  %v874 = vand.u32 %v862, 2147483648
  %v875 = vor.u32 1.1754944e-38, %v874
  %v876 = vsel %vm873, %v875, %v871
  %v877 = vmul.f32 1.0, %v876
  %v878 = vtanh.pop %v858
  %v879 = vmul.f32 %v877, %v830
  %881 = vrot.lane.b32.xlu0 %v878, 64
  %v882 = vpop.permute.xlu0 %881
  %v884 = vmul.f32 %v877, %v882
  %886 = vrot.lane.b32.xlu0 %v884, 32
  %v887 = vpop.permute.xlu0 %886
  %v889 = vadd.f32 %v879, %v887
  %v890 = vtanh.pop %v889
  %892 = vrot.lane.b32.xlu0 %v890, 64
  %v893 = vpop.permute.xlu0 %892
  %v895 = vmul.f32 %v877, %v893
  %v896 = vld [vmem:[%s418] sm:$0xff]
  %v897 = vpack.c.bf16 %v895, %v895
  %899 = vrot.lane.b32.xlu0 %v897, 32
  %v900 = vpop.permute.xlu0 %899
  %v902 = vsel %vm116, %v900, 0
  %904 = vmatpush.bf16.msra.mxu0 0
  %905 = vmatpush.bf16.msra.mxu0 0
  %906 = vmatpush.bf16.msra.mxu0 0
  %907 = vmatpush.bf16.msra.mxu0 0
  %908 = vmatpush.bf16.msra.mxu0 0
  %909 = vmatpush.bf16.msra.mxu0 0
  %910 = vmatpush.bf16.msra.mxu0 %v725
  %911 = vmatpush.bf16.msra.mxu0 %v724
  %912 = vmatmul.bf16.gmra.mxu0 %v902
  %v913 = vpop.f32.mrf.mxu0
  %v914 = vadd.f32 0.0, %v913
  %v915 = vpop.f32.mrf.mxu0
  %916 = vdwg.mxu0
  %v917 = vadd.f32 %v896, %v914
  %v918 = vxor.u32 %v917, 2147483648
  %v919 = vmul.f32 %v918, 1.442695
  %v920 = vpow.pop %v919
  %v921 = vadd.f32 %v920, 1.0
  %v922 = vrcp.pop %v921
  %v923 = vmul.f32 %v921, %v922
  %v924 = vsub.f32 1.0, %v923
  %v925 = vmul.f32 %v922, %v924
  %v926 = vadd.f32 %v922, %v925
  %vm927 = vweird.f32 %v921
  %vm928 = vweird.f32 %v922
  %vm929 = vmor %vm927, %vm928
  %v930 = vsel %vm929, %v922, %v926
  %v931 = vand.u32 2147483647, %v921
  %vm932 = vcmp.eq.f32.partialorder %v931, 8.507059e+37
  %v933 = vand.u32 %v921, 2147483648
  %v934 = vor.u32 1.1754944e-38, %v933
  %v935 = vsel %vm932, %v934, %v930
  %v936 = vmul.f32 1.0, %v935
  %v937 = vtanh.pop %v917
  %v938 = vmul.f32 %v936, %v889
  %940 = vrot.lane.b32.xlu0 %v937, 64
  %v941 = vpop.permute.xlu0 %940
  %v943 = vmul.f32 %v936, %v941
  %945 = vrot.lane.b32.xlu0 %v943, 32
  %v946 = vpop.permute.xlu0 %945
  %v948 = vadd.f32 %v938, %v946
  %v949 = vtanh.pop %v948
  %951 = vrot.lane.b32.xlu0 %v949, 64
  %v952 = vpop.permute.xlu0 %951
  %v954 = vmul.f32 %v936, %v952
  %v955 = vld [vmem:[%s493] sm:$0xff]
  %v956 = vpack.c.bf16 %v954, %v954
  %958 = vrot.lane.b32.xlu0 %v956, 32
  %v959 = vpop.permute.xlu0 %958
  %v961 = vsel %vm116, %v959, 0
  %963 = vmatpush.bf16.msra.mxu0 0
  %964 = vmatpush.bf16.msra.mxu0 0
  %965 = vmatpush.bf16.msra.mxu0 0
  %966 = vmatpush.bf16.msra.mxu0 0
  %967 = vmatpush.bf16.msra.mxu0 0
  %968 = vmatpush.bf16.msra.mxu0 0
  %969 = vmatpush.bf16.msra.mxu0 %v725
  %970 = vmatpush.bf16.msra.mxu0 %v724
  %971 = vmatmul.bf16.gmra.mxu0 %v961
  %v972 = vpop.f32.mrf.mxu0
  %v973 = vadd.f32 0.0, %v972
  %v974 = vpop.f32.mrf.mxu0
  %975 = vdwg.mxu0
  %v976 = vadd.f32 %v955, %v973
  %v977 = vxor.u32 %v976, 2147483648
  %v978 = vmul.f32 %v977, 1.442695
  %v979 = vpow.pop %v978
  %v980 = vadd.f32 %v979, 1.0
  %v981 = vrcp.pop %v980
  %v982 = vmul.f32 %v980, %v981
  %v983 = vsub.f32 1.0, %v982
  %v984 = vmul.f32 %v981, %v983
  %v985 = vadd.f32 %v981, %v984
  %vm986 = vweird.f32 %v980
  %vm987 = vweird.f32 %v981
  %vm988 = vmor %vm986, %vm987
  %v989 = vsel %vm988, %v981, %v985
  %v990 = vand.u32 2147483647, %v980
  %vm991 = vcmp.eq.f32.partialorder %v990, 8.507059e+37
  %v992 = vand.u32 %v980, 2147483648
  %v993 = vor.u32 1.1754944e-38, %v992
  %v994 = vsel %vm991, %v993, %v989
  %v995 = vmul.f32 1.0, %v994
  %v996 = vtanh.pop %v976
  %v997 = vmul.f32 %v995, %v948
  %999 = vrot.lane.b32.xlu0 %v996, 64
  %v1000 = vpop.permute.xlu0 %999
  %v1002 = vmul.f32 %v995, %v1000
  %1004 = vrot.lane.b32.xlu0 %v1002, 32
  %v1005 = vpop.permute.xlu0 %1004
  %v1007 = vadd.f32 %v997, %v1005
  %v1008 = vtanh.pop %v1007
  %1010 = vrot.lane.b32.xlu0 %v1008, 64
  %v1011 = vpop.permute.xlu0 %1010
  %v1013 = vmul.f32 %v995, %v1011
  %v1014 = vld [vmem:[%s568] sm:$0xff]
  %v1015 = vpack.c.bf16 %v1013, %v1013
  %1017 = vrot.lane.b32.xlu0 %v1015, 32
  %v1018 = vpop.permute.xlu0 %1017
  %v1020 = vsel %vm116, %v1018, 0
  %1022 = vmatpush.bf16.msra.mxu0 0
  %1023 = vmatpush.bf16.msra.mxu0 0
  %1024 = vmatpush.bf16.msra.mxu0 0
  %1025 = vmatpush.bf16.msra.mxu0 0
  %1026 = vmatpush.bf16.msra.mxu0 0
  %1027 = vmatpush.bf16.msra.mxu0 0
  %1028 = vmatpush.bf16.msra.mxu0 %v725
  %1029 = vmatpush.bf16.msra.mxu0 %v724
  %1030 = vmatmul.bf16.gmra.mxu0 %v1020
  %v1031 = vpop.f32.mrf.mxu0
  %v1032 = vadd.f32 0.0, %v1031
  %v1033 = vpop.f32.mrf.mxu0
  %1034 = vdwg.mxu0
  %v1035 = vadd.f32 %v1014, %v1032
  %v1036 = vxor.u32 %v1035, 2147483648
  %v1037 = vmul.f32 %v1036, 1.442695
  %v1038 = vpow.pop %v1037
  %v1039 = vadd.f32 %v1038, 1.0
  %v1040 = vrcp.pop %v1039
  %v1041 = vmul.f32 %v1039, %v1040
  %v1042 = vsub.f32 1.0, %v1041
  %v1043 = vmul.f32 %v1040, %v1042
  %v1044 = vadd.f32 %v1040, %v1043
  %vm1045 = vweird.f32 %v1039
  %vm1046 = vweird.f32 %v1040
  %vm1047 = vmor %vm1045, %vm1046
  %v1048 = vsel %vm1047, %v1040, %v1044
  %v1049 = vand.u32 2147483647, %v1039
  %vm1050 = vcmp.eq.f32.partialorder %v1049, 8.507059e+37
  %v1051 = vand.u32 %v1039, 2147483648
  %v1052 = vor.u32 1.1754944e-38, %v1051
  %v1053 = vsel %vm1050, %v1052, %v1048
  %v1054 = vmul.f32 1.0, %v1053
  %v1055 = vtanh.pop %v1035
  %v1056 = vmul.f32 %v1054, %v1007
  %1058 = vrot.lane.b32.xlu0 %v1055, 64
  %v1059 = vpop.permute.xlu0 %1058
  %v1061 = vmul.f32 %v1054, %v1059
  %1063 = vrot.lane.b32.xlu0 %v1061, 32
  %v1064 = vpop.permute.xlu0 %1063
  %v1066 = vadd.f32 %v1056, %v1064
  %v1067 = vtanh.pop %v1066
  %1069 = vrot.lane.b32.xlu0 %v1067, 64
  %v1070 = vpop.permute.xlu0 %1069
  %v1072 = vmul.f32 %v1054, %v1070
  %v1073 = vld [vmem:[%s643] sm:$0xff]
  %v1074 = vpack.c.bf16 %v1072, %v1072
  %1076 = vrot.lane.b32.xlu0 %v1074, 32
  %v1077 = vpop.permute.xlu0 %1076
  %v1079 = vsel %vm116, %v1077, 0
  %1081 = vmatpush.bf16.msra.mxu0 0
  %1082 = vmatpush.bf16.msra.mxu0 0
  %1083 = vmatpush.bf16.msra.mxu0 0
  %1084 = vmatpush.bf16.msra.mxu0 0
  %1085 = vmatpush.bf16.msra.mxu0 0
  %1086 = vmatpush.bf16.msra.mxu0 0
  %1087 = vmatpush.bf16.msra.mxu0 %v725
  %1088 = vmatpush.bf16.msra.mxu0 %v724
  %1089 = vmatmul.bf16.gmra.mxu0 %v1079
  %v1090 = vpop.f32.mrf.mxu0
  %v1091 = vadd.f32 0.0, %v1090
  %v1092 = vpop.f32.mrf.mxu0
  %1093 = vdwg.mxu0
  %v1094 = vadd.f32 %v1073, %v1091
  %v1095 = vxor.u32 %v1094, 2147483648
  %v1096 = vmul.f32 %v1095, 1.442695
  %v1097 = vpow.pop %v1096
  %v1098 = vadd.f32 %v1097, 1.0
  %v1099 = vrcp.pop %v1098
  %v1100 = vmul.f32 %v1098, %v1099
  %v1101 = vsub.f32 1.0, %v1100
  %v1102 = vmul.f32 %v1099, %v1101
  %v1103 = vadd.f32 %v1099, %v1102
  %vm1104 = vweird.f32 %v1098
  %vm1105 = vweird.f32 %v1099
  %vm1106 = vmor %vm1104, %vm1105
  %v1107 = vsel %vm1106, %v1099, %v1103
  %v1108 = vand.u32 2147483647, %v1098
  %vm1109 = vcmp.eq.f32.partialorder %v1108, 8.507059e+37
  %v1110 = vand.u32 %v1098, 2147483648
  %v1111 = vor.u32 1.1754944e-38, %v1110
  %v1112 = vsel %vm1109, %v1111, %v1107
  %v1113 = vmul.f32 1.0, %v1112
  %v1114 = vtanh.pop %v1094
  %v1115 = vmul.f32 %v1113, %v1066
  %1117 = vrot.lane.b32.xlu0 %v1114, 64
  %v1118 = vpop.permute.xlu0 %1117
  %v1120 = vmul.f32 %v1113, %v1118
  %1122 = vrot.lane.b32.xlu0 %v1120, 32
  %v1123 = vpop.permute.xlu0 %1122
  %v1125 = vadd.f32 %v1115, %v1123
  %v1126 = vtanh.pop %v1125
  %1128 = vrot.lane.b32.xlu0 %v1126, 64
  %v1129 = vpop.permute.xlu0 %1128
  %v1131 = vmul.f32 %v1113, %v1129
  %v1132 = vld [vmem:[%s718] sm:$0xff]
  %v1133 = vpack.c.bf16 %v1131, %v1131
  %1135 = vrot.lane.b32.xlu0 %v1133, 32
  %v1136 = vpop.permute.xlu0 %1135
  %v1138 = vsel %vm116, %v1136, 0
  %1140 = vmatpush.bf16.msra.mxu0 0
  %1141 = vmatpush.bf16.msra.mxu0 0
  %1142 = vmatpush.bf16.msra.mxu0 0
  %1143 = vmatpush.bf16.msra.mxu0 0
  %1144 = vmatpush.bf16.msra.mxu0 0
  %1145 = vmatpush.bf16.msra.mxu0 0
  %1146 = vmatpush.bf16.msra.mxu0 %v725
  %1147 = vmatpush.bf16.msra.mxu0 %v724
  %1148 = vmatmul.bf16.gmra.mxu0 %v1138
  %v1149 = vpop.f32.mrf.mxu0
  %v1150 = vadd.f32 0.0, %v1149
  %v1151 = vpop.f32.mrf.mxu0
  %1152 = vdwg.mxu0
  %v1153 = vadd.f32 %v1132, %v1150
  %v1154 = vxor.u32 %v1153, 2147483648
  %v1155 = vmul.f32 %v1154, 1.442695
  %v1156 = vpow.pop %v1155
  %v1157 = vadd.f32 %v1156, 1.0
  %v1158 = vrcp.pop %v1157
  %v1159 = vmul.f32 %v1157, %v1158
  %v1160 = vsub.f32 1.0, %v1159
  %v1161 = vmul.f32 %v1158, %v1160
  %v1162 = vadd.f32 %v1158, %v1161
  %vm1163 = vweird.f32 %v1157
  %vm1164 = vweird.f32 %v1158
  %vm1165 = vmor %vm1163, %vm1164
  %v1166 = vsel %vm1165, %v1158, %v1162
  %v1167 = vand.u32 2147483647, %v1157
  %vm1168 = vcmp.eq.f32.partialorder %v1167, 8.507059e+37
  %v1169 = vand.u32 %v1157, 2147483648
  %v1170 = vor.u32 1.1754944e-38, %v1169
  %v1171 = vsel %vm1168, %v1170, %v1166
  %v1172 = vmul.f32 1.0, %v1171
  %v1173 = vtanh.pop %v1153
  %v1174 = vmul.f32 %v1172, %v1125
  %1176 = vrot.lane.b32.xlu0 %v1173, 64
  %v1177 = vpop.permute.xlu0 %1176
  %v1179 = vmul.f32 %v1172, %v1177
  %1181 = vrot.lane.b32.xlu0 %v1179, 32
  %v1182 = vpop.permute.xlu0 %1181
  %v1184 = vadd.f32 %v1174, %v1182
  %v1185 = vtanh.pop %v1184
  %1187 = vrot.lane.b32.xlu0 %v1185, 64
  %v1188 = vpop.permute.xlu0 %1187
  %v1190 = vmul.f32 %v1172, %v1188
  %v1191 = vpack.c.bf16 %v1190, %v1190
  %v1192 = vld [vmem:[%s7] sm:$0xff]
  %v1193 = vld [vmem:[%s7 + $0x8] sm:$0xff]
  %v1194 = vld [vmem:[%s7 + $0x10] sm:$0xff]
  %v1195 = vld [vmem:[%s7 + $0x18] sm:$0xff]
  %v1196 = vpack.c.bf16 %v1193, %v1192
  %v1197 = vpack.c.bf16 %v1195, %v1194
  %v1198 = vld [vmem:[%s8] sm:$0x1]
  %v1200 = vperm.slane %v1198, 0
  %1203 = vrot.lane.b32.xlu0 %v1191, 32
  %v1204 = vpop.permute.xlu0 %1203
  %v1206 = vsel %vm116, %v1204, 0
  %1208 = vmatpush.bf16.msra.mxu0 0
  %1209 = vmatpush.bf16.msra.mxu0 0
  %1210 = vmatpush.bf16.msra.mxu0 0
  %1211 = vmatpush.bf16.msra.mxu0 0
  %1212 = vmatpush.bf16.msra.mxu0 0
  %1213 = vmatpush.bf16.msra.mxu0 0
  %1214 = vmatpush.bf16.msra.mxu0 %v1197
  %1215 = vmatpush.bf16.msra.mxu0 %v1196
  %1216 = vmatmul.bf16.gmra.mxu0 %v1206
  %v1217 = vpop.f32.mrf.mxu0
  %v1218 = vadd.f32 %v1200, %v1217
  %v1219 = vpop.f32.mrf.mxu0
  %1220 = vdwg.mxu0
  %vm1221 = vcmask 64512
  %1222 = vst.msk [vmem:[%s9] sm:$0xff] %vm1221, %v1218
  // Predicated region
  $region38: #{lstm_model_forward.1} parent=0 // pred_check
    _
  $region39: #{lstm_model_forward.1} parent=0 // pred_check_branch
    %1224 = sbr.rel (0) target = $region41
  $region40: #{lstm_model_forward.1} parent=0 // pred_region
    _
  $region41: #{lstm_model_forward.1} parent=0 // pred_fallthru
    _
  // Predicated region
  $region42: #{lstm_model_forward.1} parent=0 // pred_check
    _
  $region43: #{lstm_model_forward.1} parent=0 // pred_check_branch
    %1226 = sbr.rel (0) target = $region45
  $region44: #{lstm_model_forward.1} parent=0 // pred_region
    _
  $region45: #{lstm_model_forward.1} parent=0 // pred_fallthru
    _

</llo_original>
